<compile_context>
chip_gen: v7x
topology: tpu7x:2x2x1
jax: 0.10.0
libtpu: 0.0.40
codegen_flags: <defaults>
</compile_context>

<pallas_src>
import jax
import jax.numpy as jnp
from jax.experimental import pallas as pl
from jax.experimental.pallas import tpu as pltpu


def _round_up(x, m):
    return (x + m - 1) // m * m


def _pick_tile_m(m_pad8, cap):
    """Largest 8-multiple divisor of m_pad8 that is <= cap; fall back to cap."""
    cap = min(max(_round_up(cap, 8), 8), m_pad8)
    best = 8
    for t in range(cap, 7, -8):
        if m_pad8 % t == 0:
            best = t
            break
    if best * 2 < cap:
        # No decent divisor -> accept a padded tail; padded rows are all-zero
        # (including the ones-column), so they contribute 0 to the pooled sum.
        return cap
    return best


# ---------- fused kernel: conv-matmul (+folded BN) + ReLU + GAP + Linear ----------
def _make_fused_kernel(m_valid):
    inv_m = 1.0 / float(m_valid)

    def kernel(p_ref, w_ref, ew_ref, eb_ref, o_ref, acc_ref):
        t = pl.program_id(1)

        @pl.when(t == 0)
        def _init():
            acc_ref[...] = jnp.zeros_like(acc_ref)

        # Conv as matmul.  BN scale is folded into w; BN shift lives in the
        # appended ones-column row of w, so no separate VPU add is needed.
        # Padded M-rows of p are all-zero -> y == 0 -> no mask required.
        y = jnp.dot(p_ref[0], w_ref[...], preferred_element_type=jnp.float32)
        y = jnp.maximum(y, 0.0)

        # Global-average-pool accumulation (sum now, divide at finalize).
        acc_ref[...] += jnp.sum(y, axis=0, keepdims=True)

        @pl.when(t == pl.num_programs(1) - 1)
        def _finalize():
            pooled = acc_ref[...] * inv_m                                  # (1, C)
            o_ref[0] = (
                jnp.dot(pooled, ew_ref[...], preferred_element_type=jnp.float32)
                + eb_ref[...]
            )

    return kernel


# ---------- JAX glue: im2col + parameter folding ----------------------------------
def im2col(x_nhwc, kh, kw, stride, pad):
    x = jnp.pad(x_nhwc, ((0, 0), (pad, pad), (pad, pad), (0, 0)))
    B, H, W, C = x.shape
    Ho = (H - kh) // stride + 1
    Wo = (W - kw) // stride + 1
    cols = []
    for i in range(kh):
        for j in range(kw):
            cols.append(x[:, i : i + stride * Ho : stride, j : j + stride * Wo : stride, :])
    p = jnp.stack(cols, axis=3)                       # (B, Ho, Wo, kh*kw, C)
    return p.reshape(B, Ho * Wo, kh * kw * C), Ho, Wo


def encoder_cnn(images_nchw, conv_w, gamma, beta, mean, var, embed_w, embed_b,
                *, eps=1e-5, tile_m=2048):
    B = images_nchw.shape[0]
    Cout = conv_w.shape[0]
    E = embed_w.shape[0]

    # Cast to bf16 BEFORE im2col so the 49-tap stack/pad intermediates are half-size.
    # (This quantizes the *input image values*, not just the matmul.)
    x = jnp.transpose(images_nchw, (0, 2, 3, 1)).astype(jnp.bfloat16)  # NCHW -> NHWC
    patches, Ho, Wo = im2col(x, 7, 7, stride=2, pad=3)                 # (B, M, K) bf16
    M = Ho * Wo
    K = patches.shape[-1]

    # BN folded into the weights: scale multiplies the conv weights, the shift
    # becomes an extra K-row paired with a ones-column in the patches.
    inv_std = gamma / jnp.sqrt(var + eps)
    w_mat = jnp.transpose(conv_w, (2, 3, 1, 0)).reshape(K, Cout) * inv_std[None, :]
    shift = (beta - mean * inv_std).reshape(1, Cout)
    w_folded = jnp.concatenate([w_mat, shift], axis=0)                 # (K+1, Cout)

    K1 = K + 1
    K_pad = _round_up(K1, 128)
    M_pad8 = _round_up(M, 8)
    tile = _pick_tile_m(M_pad8, tile_m)
    n_t = pl.cdiv(M_pad8, tile)
    M_pad = n_t * tile

    # Ones-column only on the M valid rows; single fused pad of M and K.
    ones_col = jnp.ones((B, M, 1), jnp.bfloat16)
    patches = jnp.concatenate([patches, ones_col], axis=-1)            # (B, M, K+1)
    patches = jnp.pad(patches, ((0, 0), (0, M_pad - M), (0, K_pad - K1)))
    w_folded = jnp.pad(w_folded, ((0, K_pad - K1), (0, 0))).astype(jnp.bfloat16)

    ew = jnp.transpose(embed_w).astype(jnp.float32)                    # (Cout, E)
    eb = embed_b.reshape(1, E).astype(jnp.float32)

    # Explicit VMEM budget (double-buffered blocks + weights + scratch, with headroom)
    # so fat tiles also work under v5e's 16 MiB default scoped limit.
    block_bytes = (2 * tile * K_pad * 2            # patch tile, 2 buffers, bf16
                   + 2 * K_pad * Cout * 2          # folded conv weights
                   + 2 * Cout * E * 4 + 2 * E * 4  # embed W / b
                   + 2 * E * 4 + Cout * 4)         # output block + GAP accumulator
    vmem_limit = min(64 * 1024 * 1024, max(16 * 1024 * 1024, 2 * block_bytes))

    out = pl.pallas_call(
        _make_fused_kernel(M),
        out_shape=jax.ShapeDtypeStruct((B, 1, E), jnp.float32),
        grid=(B, n_t),
        in_specs=[
            pl.BlockSpec((1, tile, K_pad), lambda b, t: (b, t, 0)),    # patches tile
            pl.BlockSpec((K_pad, Cout), lambda b, t: (0, 0)),          # folded conv W (+shift row)
            pl.BlockSpec((Cout, E), lambda b, t: (0, 0)),              # embed W
            pl.BlockSpec((1, E), lambda b, t: (0, 0)),                 # embed b
        ],
        out_specs=pl.BlockSpec((1, 1, E), lambda b, t: (b, 0, 0)),     # resident over t
        scratch_shapes=[pltpu.VMEM((1, Cout), jnp.float32)],           # GAP accumulator
        compiler_params=pltpu.CompilerParams(
            dimension_semantics=("parallel", "arbitrary"),
            vmem_limit_bytes=int(vmem_limit)),
    )(patches, w_folded, ew, eb)
    return out[:, 0, :]                                                # (B, E)


if __name__ == "__main__":
    key = jax.random.PRNGKey(0)
    B, Cin, H, W = 2, 3, 56, 56
    stem_c = 128        # feature channels of truncated backbone (2048 in real ResNet-50)
    embed_size = 32
    k1, k2, k3, k4, k5, k6, k7 = jax.random.split(key, 7)

    images = jax.random.normal(k1, (B, Cin, H, W), jnp.float32)
    conv_w = 0.05 * jax.random.normal(k2, (stem_c, Cin, 7, 7), jnp.float32)
    bn_gamma = 1.0 + 0.1 * jax.random.normal(k3, (stem_c,), jnp.float32)
    bn_beta = 0.1 * jax.random.normal(k4, (stem_c,), jnp.float32)
    bn_mean = 0.1 * jax.random.normal(k5, (stem_c,), jnp.float32)
    bn_var = 1.0 + jnp.abs(jax.random.normal(k6, (stem_c,), jnp.float32))
    embed_w = 0.05 * jax.random.normal(k7, (embed_size, stem_c), jnp.float32)
    embed_b = 0.01 * jnp.arange(embed_size, dtype=jnp.float32)

    feats = encoder_cnn(images, conv_w, bn_gamma, bn_beta, bn_mean, bn_var,
                        embed_w, embed_b)
    feats = jax.block_until_ready(feats)
    assert feats.shape == (B, embed_size)

    # pure-JAX reference (same semantics, NCHW, f32)
    eps = 1e-5
    conv = jax.lax.conv_general_dilated(
        images, conv_w, window_strides=(2, 2), padding=((3, 3), (3, 3)),
        dimension_numbers=("NCHW", "OIHW", "NCHW"),
        precision=jax.lax.Precision.HIGHEST)
    inv_std = bn_gamma / jnp.sqrt(bn_var + eps)
    bn = conv * inv_std.reshape(1, -1, 1, 1) + (bn_beta - bn_mean * inv_std).reshape(1, -1, 1, 1)
    act = jnp.maximum(bn, 0.0)
    pooled_ref = jnp.mean(act, axis=(2, 3))                      # (B, stem_c)
    ref = pooled_ref @ embed_w.T + embed_b
    err = float(jnp.max(jnp.abs(feats - ref)))
    # tolerance covers bf16 quantization of the input patches and folded weights
    assert jnp.allclose(feats, ref, rtol=2e-2, atol=2e-2), err

    print("KERNEL_OK")
</pallas_src>

<mosaic_0001>
module attributes {stable_mosaic.version = 11 : i64} {
  func.func @kernel(%arg0: i32, %arg1: i32, %arg2: memref<1x784x256xbf16, #tpu.memory_space<vmem>>, %arg3: memref<256x128xbf16, #tpu.memory_space<vmem>>, %arg4: memref<128x32xf32, #tpu.memory_space<vmem>>, %arg5: memref<1x32xf32, #tpu.memory_space<vmem>>, %arg6: memref<1x1x32xf32, #tpu.memory_space<vmem>>, %arg7: memref<1x128xf32, #tpu.memory_space<vmem>>) attributes {dimension_semantics = [#tpu.dimension_semantics<parallel>, #tpu.dimension_semantics<arbitrary>], iteration_bounds = array<i64: 2, 1>, scalar_prefetch = 0 : i64, scratch_operands = 1 : i64, tpu.core_type = #tpu.core_type<tc>, window_params = [{transform_indices = @transform_0, window_bounds = array<i64: 1, 784, 256>}, {pipeline_mode = #tpu.pipeline_mode<synchronous>, transform_indices = @transform_1, window_bounds = array<i64: 256, 128>}, {pipeline_mode = #tpu.pipeline_mode<synchronous>, transform_indices = @transform_2, window_bounds = array<i64: 128, 32>}, {pipeline_mode = #tpu.pipeline_mode<synchronous>, transform_indices = @transform_3, window_bounds = array<i64: 1, 32>}, {transform_indices = @transform_4, window_bounds = array<i64: 1, 1, 32>}]} {
    %c0_i32 = arith.constant 0 : i32
    %0 = arith.cmpi eq, %arg1, %c0_i32 : i32
    %1 = arith.extui %0 : i1 to i32
    %c0_i32_0 = arith.constant 0 : i32
    %2 = arith.cmpi ne, %1, %c0_i32_0 : i32
    scf.if %2 {
      %cst_13 = arith.constant 0.000000e+00 : f32
      %17 = vector.broadcast %cst_13 : f32 to vector<1x128xf32>
      %c0_14 = arith.constant 0 : index
      %c0_15 = arith.constant 0 : index
      %18 = vector.load %arg7[%c0_14, %c0_15] : memref<1x128xf32, #tpu.memory_space<vmem>>, vector<1x128xf32>
      tpu.vector_store %arg7[%c0_14, %c0_15], %17 {strides = array<i32>} : memref<1x128xf32, #tpu.memory_space<vmem>>, vector<1x128xf32>,
    } else {
    }
    %c0 = arith.constant 0 : index
    %c0_1 = arith.constant 0 : index
    %c0_2 = arith.constant 0 : index
    %3 = vector.load %arg2[%c0, %c0_1, %c0_2] : memref<1x784x256xbf16, #tpu.memory_space<vmem>>, vector<1x784x256xbf16>
    %4 = vector.shape_cast %3 : vector<1x784x256xbf16> to vector<784x256xbf16>
    %c0_3 = arith.constant 0 : index
    %c0_4 = arith.constant 0 : index
    %5 = vector.load %arg3[%c0_3, %c0_4] : memref<256x128xbf16, #tpu.memory_space<vmem>>, vector<256x128xbf16>
    %cst = arith.constant dense<0.000000e+00> : vector<784x128xf32>
    %6 = tpu.matmul %4, %5, %cst {dimension_numbers = #tpu.dot_dimension_numbers<[1], [0], [0], [1], [0, 0, 1, 1], [], []>} : vector<784x256xbf16>, vector<256x128xbf16>, vector<784x128xf32> -> vector<784x128xf32>
    %cst_5 = arith.constant 0.000000e+00 : f32
    %7 = vector.broadcast %cst_5 : f32 to vector<784x128xf32>
    %8 = arith.maximumf %6, %7 : vector<784x128xf32>
    %c0_6 = arith.constant 0 : index
    %c0_7 = arith.constant 0 : index
    %9 = vector.load %arg7[%c0_6, %c0_7] : memref<1x128xf32, #tpu.memory_space<vmem>>, vector<1x128xf32>
    %cst_8 = arith.constant dense<0.000000e+00> : vector<128xf32>
    %10 = vector.multi_reduction <add>, %8, %cst_8 [0] : vector<784x128xf32> to vector<128xf32>
    %11 = vector.shape_cast %10 : vector<128xf32> to vector<1x128xf32>
    %12 = arith.addf %9, %11 : vector<1x128xf32>
    %c0_9 = arith.constant 0 : index
    %c0_10 = arith.constant 0 : index
    %13 = vector.load %arg7[%c0_9, %c0_10] : memref<1x128xf32, #tpu.memory_space<vmem>>, vector<1x128xf32>
    tpu.vector_store %arg7[%c0_9, %c0_10], %12 {strides = array<i32>} : memref<1x128xf32, #tpu.memory_space<vmem>>, vector<1x128xf32>,
    %c0_i32_11 = arith.constant 0 : i32
    %14 = arith.cmpi eq, %arg1, %c0_i32_11 : i32
    %15 = arith.extui %14 : i1 to i32
    %c0_i32_12 = arith.constant 0 : i32
    %16 = arith.cmpi ne, %15, %c0_i32_12 : i32
    scf.if %16 {
      %c0_13 = arith.constant 0 : index
      %c0_14 = arith.constant 0 : index
      %17 = vector.load %arg7[%c0_13, %c0_14] : memref<1x128xf32, #tpu.memory_space<vmem>>, vector<1x128xf32>
      %cst_15 = arith.constant 0.00127551018 : f32
      %18 = vector.broadcast %cst_15 : f32 to vector<1x128xf32>
      %19 = arith.mulf %17, %18 : vector<1x128xf32>
      %c0_16 = arith.constant 0 : index
      %c0_17 = arith.constant 0 : index
      %20 = vector.load %arg4[%c0_16, %c0_17] : memref<128x32xf32, #tpu.memory_space<vmem>>, vector<128x32xf32>
      %cst_18 = arith.constant dense<0.000000e+00> : vector<1x32xf32>
      %21 = tpu.matmul %19, %20, %cst_18 {dimension_numbers = #tpu.dot_dimension_numbers<[1], [0], [0], [1], [0, 0, 1, 1], [], []>} : vector<1x128xf32>, vector<128x32xf32>, vector<1x32xf32> -> vector<1x32xf32>
      %c0_19 = arith.constant 0 : index
      %c0_20 = arith.constant 0 : index
      %22 = vector.load %arg5[%c0_19, %c0_20] : memref<1x32xf32, #tpu.memory_space<vmem>>, vector<1x32xf32>
      %23 = arith.addf %21, %22 : vector<1x32xf32>
      %c0_21 = arith.constant 0 : index
      %c0_22 = arith.constant 0 : index
      %c0_23 = arith.constant 0 : index
      %24 = vector.load %arg6[%c0_21, %c0_22, %c0_23] : memref<1x1x32xf32, #tpu.memory_space<vmem>>, vector<1x1x32xf32>
      %25 = vector.shape_cast %24 : vector<1x1x32xf32> to vector<1x32xf32>
      %26 = vector.shape_cast %23 : vector<1x32xf32> to vector<1x1x32xf32>
      tpu.vector_store %arg6[%c0_21, %c0_22, %c0_23], %26 {strides = array<i32>} : memref<1x1x32xf32, #tpu.memory_space<vmem>>, vector<1x1x32xf32>,
    } else {
    }
    return
  }
  func.func @transform_0(%arg0: i32, %arg1: i32) -> (i32, i32, i32) {
    %c0_i32 = arith.constant 0 : i32
    %c0_i32_0 = arith.constant 0 : i32
    return %arg0, %arg1, %c0_i32 : i32, i32, i32
  }
  func.func @transform_1(%arg0: i32, %arg1: i32) -> (i32, i32) {
    %c0_i32 = arith.constant 0 : i32
    %c0_i32_0 = arith.constant 0 : i32
    %c0_i32_1 = arith.constant 0 : i32
    return %c0_i32, %c0_i32_0 : i32, i32
  }
  func.func @transform_2(%arg0: i32, %arg1: i32) -> (i32, i32) {
    %c0_i32 = arith.constant 0 : i32
    %c0_i32_0 = arith.constant 0 : i32
    %c0_i32_1 = arith.constant 0 : i32
    return %c0_i32, %c0_i32_0 : i32, i32
  }
  func.func @transform_3(%arg0: i32, %arg1: i32) -> (i32, i32) {
    %c0_i32 = arith.constant 0 : i32
    %c0_i32_0 = arith.constant 0 : i32
    %c0_i32_1 = arith.constant 0 : i32
    return %c0_i32, %c0_i32_0 : i32, i32
  }
  func.func @transform_4(%arg0: i32, %arg1: i32) -> (i32, i32, i32) {
    %c0_i32 = arith.constant 0 : i32
    %c0_i32_0 = arith.constant 0 : i32
    %c0_i32_1 = arith.constant 0 : i32
    return %arg0, %c0_i32, %c0_i32_0 : i32, i32, i32
  }
}

</mosaic_0001>

<llo_original>
// kernel: tpu_custom_call.1
$region0: #{tpu_custom_call.1}
  #allocation0 [shape = 'u32[]', space=smem, size = 0x4, offset = 0x4, fixed_abs, tag = 'smem constant byte address 0x4 - core index']
  #allocation1 [shape = 'u32[144,128]{1,0:T(1,128)}', space=vmem, size = 0x12000, scoped, tag = 'internal scratch']
  #allocation2 [shape = 'f32[1,128]{1,0:T(1,128)}', space=vmem, size = 0x200, scoped, tag = 'scratch operand']
  %s0 = inlined_call_operand.hbm [shape: bf16[2,784,256], index: 0, kind: input, shape index: {}]
  %s1 = inlined_call_operand.vmem [shape: bf16[256,128], index: 1, kind: input, shape index: {}]
  %s2 = inlined_call_operand.vmem [shape: f32[128,32], index: 2, kind: input, shape index: {}]
  %s3 = inlined_call_operand.vmem [shape: f32[1,32], index: 3, kind: input, shape index: {}]
  %s4 = inlined_call_operand.hbm [shape: f32[2,1,32], index: 4, kind: output, shape index: {}]
  %s5 = sld [smem:[#allocation0]]
  $region61: #{tpu_custom_call.1} parent=0
    _
  %s7 = ssub.s32 1, %s5
  %s8 = scalar_select 0, %s7, %s5
  $region1: #{tpu_custom_call.1} parent=0
    #allocation3 [shape = 'u8[802816]{0}', space=vmem, size = 0xc4000, scoped, tag = 'input window, operand 0']
    #allocation4 [shape = 's32[2]{0}', space=sflag, size = 0x8, scoped, tag = 'scoped memory for tpu_custom_call.1']
    #allocation5 [shape = 's32[2]{0}', space=sflag, size = 0x8, scoped, tag = 'scoped memory for tpu_custom_call.1']
    #allocation6 [shape = 'u8[1024]{0}', space=vmem, size = 0x400, scoped, tag = 'output window, operand 0']
    %9 = vsyncpa [#allocation4], 0
    %s10 = scalar_lea.sflag [#allocation4], 1
    %11 = vsyncpa %s10, 0
    %12 = vsyncpa [#allocation5], 0
    %s13 = scalar_lea.sflag [#allocation5], 1
    %14 = vsyncpa %s13, 0
    loop: start=0, step=1, limit=4
    $region2: #{tpu_custom_call.1} parent=1 // loop_pre_header
      _
    $region3: #{tpu_custom_call.1} parent=1 // loop_header
      %s16 = sphi 0, %s20
      %p17 = scmp.ge.s32.totalorder %s16, 4
      %s23 = sphi 0, %s35
      %s24 = sphi 0, %s31
      %s25 = sphi 0, %s23
      %s26 = sphi 0, %s24
      %s27 = sphi 0, %s25
      %s28 = sphi 0, %s26
      %s40 = sphi 0, %s42
      %s43 = sphi 0, %s40
      %s44 = sphi 0, %s43
      %s60 = sphi 0, %s44
      %s64 = sphi 0, %s64
      %s66 = sphi 0, %s64
      %s67 = sphi 0, %s66
      %s81 = sphi 0, %s67
      %s85 = sphi 0, %s85
      %s87 = sphi 0, %s85
      %s88 = sphi 0, %s87
      %s102 = sphi 0, %s88
      %s106 = sphi 0, %s106
      %s108 = sphi 0, %s106
      %s109 = sphi 0, %s108
      %s123 = sphi 0, %s109
      %s129 = sphi 0, %s131
      %s132 = sphi 0, %s129
      %s133 = sphi 0, %s132
      %s149 = sphi 0, %s133
    $region4: #{tpu_custom_call.1} parent=1 // loop_header_branch
      %19 = sbr.rel (%p17) target = $region8
    $region5: #{tpu_custom_call.1} parent=1 // loop_body
      %s21 = ssub.s32 %s16, 1
      %s22 = ssub.s32 %s16, 2
      %s29 = sadd.s32 1, %s24
      %p30 = scmp.ge.s32.totalorder %s29, 1
      %s31 = scalar_select %p30, 0, %s29
      %s32 = sadd.s32 1, %s23
      %s33 = scalar_select %p30, %s32, %s23
      %p34 = scmp.ge.s32.totalorder %s33, 2
      %s35 = scalar_select %p34, 0, %s33
      %s36 = ssub.s32 %s23, %s35
      %s37 = ssub.s32 %s24, %s31
      %s38 = sor.u32 %s36, %s37
      %p39 = scmp.eq.s32.totalorder %s38, 0
      %s41 = sadd.s32 %s40, 1
      %s42 = scalar_select %p39, %s40, %s41
      %p45 = pneg %p39
      %p46 = scmp.eq.s32.totalorder %s16, 1
      %p47 = por %p45, %p46
      %p48 = scmp.ne.s32.totalorder %s40, %s43
      %p49 = scmp.eq.s32.totalorder %s16, 0
      %p50 = por %p48, %p49
      %p51 = scmp.ne.s32.totalorder %s40, %s43
      %p52 = scmp.eq.s32.totalorder %s21, 1
      %p53 = por %p51, %p52
      %p54 = scmp.ne.s32.totalorder %s43, %s44
      %p55 = scmp.eq.s32.totalorder %s21, 0
      %p56 = por %p54, %p55
      %p57 = scmp.ne.s32.totalorder %s43, %s44
      %p58 = scmp.eq.s32.totalorder %s22, 1
      %p59 = por %p57, %p58
      %p61 = scmp.ne.s32.totalorder %s44, %s60
      %p62 = scmp.eq.s32.totalorder %s22, 0
      %p63 = por %p61, %p62
      %s65 = sadd.s32 %s64, 1
      %p68 = scmp.eq.s32.totalorder %s16, 1
      %p69 = scmp.ne.s32.totalorder %s64, %s66
      %p70 = scmp.eq.s32.totalorder %s16, 0
      %p71 = por %p69, %p70
      %p72 = scmp.ne.s32.totalorder %s64, %s66
      %p73 = scmp.eq.s32.totalorder %s21, 1
      %p74 = por %p72, %p73
      %p75 = scmp.ne.s32.totalorder %s66, %s67
      %p76 = scmp.eq.s32.totalorder %s21, 0
      %p77 = por %p75, %p76
      %p78 = scmp.ne.s32.totalorder %s66, %s67
      %p79 = scmp.eq.s32.totalorder %s22, 1
      %p80 = por %p78, %p79
      %p82 = scmp.ne.s32.totalorder %s67, %s81
      %p83 = scmp.eq.s32.totalorder %s22, 0
      %p84 = por %p82, %p83
      %s86 = sadd.s32 %s85, 1
      %p89 = scmp.eq.s32.totalorder %s16, 1
      %p90 = scmp.ne.s32.totalorder %s85, %s87
      %p91 = scmp.eq.s32.totalorder %s16, 0
      %p92 = por %p90, %p91
      %p93 = scmp.ne.s32.totalorder %s85, %s87
      %p94 = scmp.eq.s32.totalorder %s21, 1
      %p95 = por %p93, %p94
      %p96 = scmp.ne.s32.totalorder %s87, %s88
      %p97 = scmp.eq.s32.totalorder %s21, 0
      %p98 = por %p96, %p97
      %p99 = scmp.ne.s32.totalorder %s87, %s88
      %p100 = scmp.eq.s32.totalorder %s22, 1
      %p101 = por %p99, %p100
      %p103 = scmp.ne.s32.totalorder %s88, %s102
      %p104 = scmp.eq.s32.totalorder %s22, 0
      %p105 = por %p103, %p104
      %s107 = sadd.s32 %s106, 1
      %p110 = scmp.eq.s32.totalorder %s16, 1
      %p111 = scmp.ne.s32.totalorder %s106, %s108
      %p112 = scmp.eq.s32.totalorder %s16, 0
      %p113 = por %p111, %p112
      %p114 = scmp.ne.s32.totalorder %s106, %s108
      %p115 = scmp.eq.s32.totalorder %s21, 1
      %p116 = por %p114, %p115
      %p117 = scmp.ne.s32.totalorder %s108, %s109
      %p118 = scmp.eq.s32.totalorder %s21, 0
      %p119 = por %p117, %p118
      %p120 = scmp.ne.s32.totalorder %s108, %s109
      %p121 = scmp.eq.s32.totalorder %s22, 1
      %p122 = por %p120, %p121
      %p124 = scmp.ne.s32.totalorder %s109, %s123
      %p125 = scmp.eq.s32.totalorder %s22, 0
      %p126 = por %p124, %p125
      %s127 = ssub.s32 %s23, %s35
      %p128 = scmp.eq.s32.totalorder %s127, 0
      %s130 = sadd.s32 %s129, 1
      %s131 = scalar_select %p128, %s129, %s130
      %p134 = pneg %p128
      %p135 = scmp.eq.s32.totalorder %s16, 1
      %p136 = por %p134, %p135
      %p137 = scmp.ne.s32.totalorder %s129, %s132
      %p138 = scmp.eq.s32.totalorder %s16, 0
      %p139 = por %p137, %p138
      %p140 = scmp.ne.s32.totalorder %s129, %s132
      %p141 = scmp.eq.s32.totalorder %s21, 1
      %p142 = por %p140, %p141
      %p143 = scmp.ne.s32.totalorder %s132, %s133
      %p144 = scmp.eq.s32.totalorder %s21, 0
      %p145 = por %p143, %p144
      %p146 = scmp.ne.s32.totalorder %s132, %s133
      %p147 = scmp.eq.s32.totalorder %s22, 1
      %p148 = por %p146, %p147
      %p150 = scmp.ne.s32.totalorder %s133, %s149
      %p151 = scmp.eq.s32.totalorder %s22, 0
      %p152 = por %p150, %p151
      %p153 = scmp.le.s32.totalorder 1, %s16
      %p154 = scmp.lt.s32.totalorder %s16, 3
      %p155 = pnand %p153, %p154
      %p156 = pneg %p155
      // Predicated region
      $region9: #{tpu_custom_call.1} parent=5 // pred_check
        _
      $region10: #{tpu_custom_call.1} parent=5 // pred_check_branch
        %158 = sbr.rel (%p155) target = $region12
      $region11: #{tpu_custom_call.1} parent=5 // pred_region
        %s159 = ssub.s32 %s16, 1
        // Predicated region
        $region13: #{tpu_custom_call.1} parent=11 // pred_check
          %p160 = pneg %p77
        $region14: #{tpu_custom_call.1} parent=11 // pred_check_branch
          %162 = sbr.rel (%p160) target = $region16
        $region15: #{tpu_custom_call.1} parent=11 // pred_region
          _
        $region16: #{tpu_custom_call.1} parent=11 // pred_fallthru
          _
        // Predicated region
        $region17: #{tpu_custom_call.1} parent=11 // pred_check
          %p163 = pneg %p98
        $region18: #{tpu_custom_call.1} parent=11 // pred_check_branch
          %165 = sbr.rel (%p163) target = $region20
        $region19: #{tpu_custom_call.1} parent=11 // pred_region
          _
        $region20: #{tpu_custom_call.1} parent=11 // pred_fallthru
          _
        // Predicated region
        $region21: #{tpu_custom_call.1} parent=11 // pred_check
          %p166 = pneg %p119
        $region22: #{tpu_custom_call.1} parent=11 // pred_check_branch
          %168 = sbr.rel (%p166) target = $region24
        $region23: #{tpu_custom_call.1} parent=11 // pred_region
          _
        $region24: #{tpu_custom_call.1} parent=11 // pred_fallthru
          _
      $region12: #{tpu_custom_call.1} parent=5 // pred_fallthru
        _
      %p169 = scmp.lt.s32.totalorder %s16, 2
      // Predicated region
      $region25: #{tpu_custom_call.1} parent=5 // pred_check
        %p170 = pneg %p169
      $region26: #{tpu_custom_call.1} parent=5 // pred_check_branch
        %172 = sbr.rel (%p170) target = $region28
      $region27: #{tpu_custom_call.1} parent=5 // pred_region
        // Predicated region
        $region29: #{tpu_custom_call.1} parent=27 // pred_check
          %p173 = pneg %p50
        $region30: #{tpu_custom_call.1} parent=27 // pred_check_branch
          %175 = sbr.rel (%p173) target = $region32
        $region31: #{tpu_custom_call.1} parent=27 // pred_region
          %s176 = sand.u32 %s40, 1
          %s177 = scalar_lea.sflag [#allocation4], %s176
          %s178 = sand.u32 %s40, 1
          %s179 = smul.addr %s178, 784
          %s180 = scalar_lea.vmem [#allocation3], %s179
          %s181 = smul.u32 98, %s24
          %s183 = ssub.s32 12544, 12544
          %184 = vsyncadd %s177, %s183
          %s185 = smul.addr %s181, 2
          %s186 = smul.addr %s23, 196
          %s187 = sadd.s32 %s185, %s186
          %s188 = smul.addr %s187, 64
          %s189 = scalar_lea.hbm %s0, %s188
          %s190 = sshll.u32 %s180, 4
          %s191 = int_to_ptr.vmem [resolvable:$true] %s190
          %196 = dma.hbm_to_vmem [thread:$0]  %s189, 12544, %s191, %s177, 128, 128, 8
        $region32: #{tpu_custom_call.1} parent=27 // pred_fallthru
          _
      $region28: #{tpu_custom_call.1} parent=5 // pred_fallthru
        _
      %p197 = scmp.le.s32.totalorder 1, %s16
      %p198 = scmp.lt.s32.totalorder %s16, 3
      %p199 = pnand %p197, %p198
      %p200 = pneg %p199
      // Predicated region
      $region33: #{tpu_custom_call.1} parent=5 // pred_check
        _
      $region34: #{tpu_custom_call.1} parent=5 // pred_check_branch
        %202 = sbr.rel (%p199) target = $region36
      $region35: #{tpu_custom_call.1} parent=5 // pred_region
        %s203 = ssub.s32 %s16, 1
        %s204 = sand.u32 %s43, 1
        %s205 = scalar_lea.sflag [#allocation4], %s204
        %s206 = sand.u32 %s43, 1
        %s207 = smul.addr %s206, 784
        %s208 = scalar_lea.vmem [#allocation3], %s207
        // Predicated region
        $region37: #{tpu_custom_call.1} parent=35 // pred_check
          %p209 = pneg %p56
        $region38: #{tpu_custom_call.1} parent=35 // pred_check_branch
          %211 = sbr.rel (%p209) target = $region40
        $region39: #{tpu_custom_call.1} parent=35 // pred_region
          %212 = dma.done %s205, 12544
        $region40: #{tpu_custom_call.1} parent=35 // pred_fallthru
          _
        %s213 = sand.u32 %s43, 1
        %s214 = scalar_lea.sflag [#allocation4], %s213
        %s215 = sand.u32 %s43, 1
        %s216 = smul.addr %s215, 784
        %s217 = scalar_lea.vmem [#allocation3], %s216
        %p218 = pneg %p56
        %p219 = pneg %p53
        %p220 = pneg %p77
        %p221 = pneg %p74
        %p222 = pneg %p98
        %p223 = pneg %p95
        %p224 = pneg %p119
        %p225 = pneg %p116
        %p226 = pneg %p145
        %p227 = pneg %p142
        %s228 = sand.u32 %s132, 1
        %s229 = scalar_lea.sflag [#allocation5], %s228
        %s230 = sand.u32 %s132, 1
        %s231 = scalar_lea.vmem [#allocation6], %s230
        %s232 = smul.u32 98, %s26
        %p234 = scmp.eq.s32.totalorder %s26, 0
        // Predicated region
        $region41: #{tpu_custom_call.1} parent=35 // pred_check
          %p235 = pneg %p234
        $region42: #{tpu_custom_call.1} parent=35 // pred_check_branch
          %237 = sbr.rel (%p235) target = $region44
        $region43: #{tpu_custom_call.1} parent=35 // pred_region
          %238 = vst [vmem:[#allocation2] sm:$0x1] 0.0
        $region44: #{tpu_custom_call.1} parent=35 // pred_fallthru
          _
        %v239 = vld [vmem:[%s208] sm:$0xff]
        %v240 = vld [vmem:[%s208 + $0x8] sm:$0xff]
        %v241 = vld [vmem:[%s208 + $0x10] sm:$0xff]
        %v242 = vld [vmem:[%s208 + $0x18] sm:$0xff]
        %v243 = vld [vmem:[%s208 + $0x20] sm:$0xff]
        %v244 = vld [vmem:[%s208 + $0x28] sm:$0xff]
        %v245 = vld [vmem:[%s208 + $0x30] sm:$0xff]
        %v246 = vld [vmem:[%s208 + $0x38] sm:$0xff]
        %v247 = vld [vmem:[%s208 + $0x40] sm:$0xff]
        %v248 = vld [vmem:[%s208 + $0x48] sm:$0xff]
        %v249 = vld [vmem:[%s208 + $0x50] sm:$0xff]
        %v250 = vld [vmem:[%s208 + $0x58] sm:$0xff]
        %v251 = vld [vmem:[%s208 + $0x60] sm:$0xff]
        %v252 = vld [vmem:[%s208 + $0x68] sm:$0xff]
        %v253 = vld [vmem:[%s208 + $0x70] sm:$0xff]
        %v254 = vld [vmem:[%s208 + $0x78] sm:$0xff]
        %v255 = vld [vmem:[%s208 + $0x80] sm:$0xff]
        %v256 = vld [vmem:[%s208 + $0x88] sm:$0xff]
        %v257 = vld [vmem:[%s208 + $0x90] sm:$0xff]
        %v258 = vld [vmem:[%s208 + $0x98] sm:$0xff]
        %v259 = vld [vmem:[%s208 + $0xa0] sm:$0xff]
        %v260 = vld [vmem:[%s208 + $0xa8] sm:$0xff]
        %v261 = vld [vmem:[%s208 + $0xb0] sm:$0xff]
        %v262 = vld [vmem:[%s208 + $0xb8] sm:$0xff]
        %v263 = vld [vmem:[%s208 + $0xc0] sm:$0xff]
        %v264 = vld [vmem:[%s208 + $0xc8] sm:$0xff]
        %v265 = vld [vmem:[%s208 + $0xd0] sm:$0xff]
        %v266 = vld [vmem:[%s208 + $0xd8] sm:$0xff]
        %v267 = vld [vmem:[%s208 + $0xe0] sm:$0xff]
        %v268 = vld [vmem:[%s208 + $0xe8] sm:$0xff]
        %v269 = vld [vmem:[%s208 + $0xf0] sm:$0xff]
        %v270 = vld [vmem:[%s208 + $0xf8] sm:$0xff]
        %v271 = vld [vmem:[%s208 + $0x100] sm:$0xff]
        %v272 = vld [vmem:[%s208 + $0x108] sm:$0xff]
        %v273 = vld [vmem:[%s208 + $0x110] sm:$0xff]
        %v274 = vld [vmem:[%s208 + $0x118] sm:$0xff]
        %v275 = vld [vmem:[%s208 + $0x120] sm:$0xff]
        %v276 = vld [vmem:[%s208 + $0x128] sm:$0xff]
        %v277 = vld [vmem:[%s208 + $0x130] sm:$0xff]
        %v278 = vld [vmem:[%s208 + $0x138] sm:$0xff]
        %v279 = vld [vmem:[%s208 + $0x140] sm:$0xff]
        %v280 = vld [vmem:[%s208 + $0x148] sm:$0xff]
        %v281 = vld [vmem:[%s208 + $0x150] sm:$0xff]
        %v282 = vld [vmem:[%s208 + $0x158] sm:$0xff]
        %v283 = vld [vmem:[%s208 + $0x160] sm:$0xff]
        %v284 = vld [vmem:[%s208 + $0x168] sm:$0xff]
        %v285 = vld [vmem:[%s208 + $0x170] sm:$0xff]
        %v286 = vld [vmem:[%s208 + $0x178] sm:$0xff]
        %v287 = vld [vmem:[%s208 + $0x180] sm:$0xff]
        %v288 = vld [vmem:[%s208 + $0x188] sm:$0xff]
        %v289 = vld [vmem:[%s208 + $0x190] sm:$0xff]
        %v290 = vld [vmem:[%s208 + $0x198] sm:$0xff]
        %v291 = vld [vmem:[%s208 + $0x1a0] sm:$0xff]
        %v292 = vld [vmem:[%s208 + $0x1a8] sm:$0xff]
        %v293 = vld [vmem:[%s208 + $0x1b0] sm:$0xff]
        %v294 = vld [vmem:[%s208 + $0x1b8] sm:$0xff]
        %v295 = vld [vmem:[%s208 + $0x1c0] sm:$0xff]
        %v296 = vld [vmem:[%s208 + $0x1c8] sm:$0xff]
        %v297 = vld [vmem:[%s208 + $0x1d0] sm:$0xff]
        %v298 = vld [vmem:[%s208 + $0x1d8] sm:$0xff]
        %v299 = vld [vmem:[%s208 + $0x1e0] sm:$0xff]
        %v300 = vld [vmem:[%s208 + $0x1e8] sm:$0xff]
        %v301 = vld [vmem:[%s208 + $0x1f0] sm:$0xff]
        %v302 = vld [vmem:[%s208 + $0x1f8] sm:$0xff]
        %v303 = vld [vmem:[%s208 + $0x200] sm:$0xff]
        %v304 = vld [vmem:[%s208 + $0x208] sm:$0xff]
        %v305 = vld [vmem:[%s208 + $0x210] sm:$0xff]
        %v306 = vld [vmem:[%s208 + $0x218] sm:$0xff]
        %v307 = vld [vmem:[%s208 + $0x220] sm:$0xff]
        %v308 = vld [vmem:[%s208 + $0x228] sm:$0xff]
        %v309 = vld [vmem:[%s208 + $0x230] sm:$0xff]
        %v310 = vld [vmem:[%s208 + $0x238] sm:$0xff]
        %v311 = vld [vmem:[%s208 + $0x240] sm:$0xff]
        %v312 = vld [vmem:[%s208 + $0x248] sm:$0xff]
        %v313 = vld [vmem:[%s208 + $0x250] sm:$0xff]
        %v314 = vld [vmem:[%s208 + $0x258] sm:$0xff]
        %v315 = vld [vmem:[%s208 + $0x260] sm:$0xff]
        %v316 = vld [vmem:[%s208 + $0x268] sm:$0xff]
        %v317 = vld [vmem:[%s208 + $0x270] sm:$0xff]
        %v318 = vld [vmem:[%s208 + $0x278] sm:$0xff]
        %v319 = vld [vmem:[%s208 + $0x280] sm:$0xff]
        %v320 = vld [vmem:[%s208 + $0x288] sm:$0xff]
        %v321 = vld [vmem:[%s208 + $0x290] sm:$0xff]
        %v322 = vld [vmem:[%s208 + $0x298] sm:$0xff]
        %v323 = vld [vmem:[%s208 + $0x2a0] sm:$0xff]
        %v324 = vld [vmem:[%s208 + $0x2a8] sm:$0xff]
        %v325 = vld [vmem:[%s208 + $0x2b0] sm:$0xff]
        %v326 = vld [vmem:[%s208 + $0x2b8] sm:$0xff]
        %v327 = vld [vmem:[%s208 + $0x2c0] sm:$0xff]
        %v328 = vld [vmem:[%s208 + $0x2c8] sm:$0xff]
        %v329 = vld [vmem:[%s208 + $0x2d0] sm:$0xff]
        %v330 = vld [vmem:[%s208 + $0x2d8] sm:$0xff]
        %v331 = vld [vmem:[%s208 + $0x2e0] sm:$0xff]
        %v332 = vld [vmem:[%s208 + $0x2e8] sm:$0xff]
        %v333 = vld [vmem:[%s208 + $0x2f0] sm:$0xff]
        %v334 = vld [vmem:[%s208 + $0x2f8] sm:$0xff]
        %v335 = vld [vmem:[%s208 + $0x300] sm:$0xff]
        %v336 = vld [vmem:[%s208 + $0x308] sm:$0xff]
        %v337 = vld [vmem:[%s1] sm:$0xf]
        %v338 = vld [vmem:[%s1 + $0x4] sm:$0xf]
        %v339 = vld [vmem:[%s1 + $0x8] sm:$0xf]
        %v340 = vld [vmem:[%s1 + $0xc] sm:$0xf]
        %v341 = vld [vmem:[%s1 + $0x10] sm:$0xf]
        %v342 = vld [vmem:[%s1 + $0x14] sm:$0xf]
        %v343 = vld [vmem:[%s1 + $0x18] sm:$0xf]
        %v344 = vld [vmem:[%s1 + $0x1c] sm:$0xf]
        %v345 = vld [vmem:[%s1 + $0x20] sm:$0xf]
        %v346 = vld [vmem:[%s1 + $0x24] sm:$0xf]
        %v347 = vld [vmem:[%s1 + $0x28] sm:$0xf]
        %v348 = vld [vmem:[%s1 + $0x2c] sm:$0xf]
        %v349 = vld [vmem:[%s1 + $0x30] sm:$0xf]
        %v350 = vld [vmem:[%s1 + $0x34] sm:$0xf]
        %v351 = vld [vmem:[%s1 + $0x38] sm:$0xf]
        %v352 = vld [vmem:[%s1 + $0x3c] sm:$0xf]
        %v353 = vld [vmem:[%s1 + $0x40] sm:$0xf]
        %v354 = vld [vmem:[%s1 + $0x44] sm:$0xf]
        %v355 = vld [vmem:[%s1 + $0x48] sm:$0xf]
        %v356 = vld [vmem:[%s1 + $0x4c] sm:$0xf]
        %v357 = vld [vmem:[%s1 + $0x50] sm:$0xf]
        %v358 = vld [vmem:[%s1 + $0x54] sm:$0xf]
        %v359 = vld [vmem:[%s1 + $0x58] sm:$0xf]
        %v360 = vld [vmem:[%s1 + $0x5c] sm:$0xf]
        %v361 = vld [vmem:[%s1 + $0x60] sm:$0xf]
        %v362 = vld [vmem:[%s1 + $0x64] sm:$0xf]
        %v363 = vld [vmem:[%s1 + $0x68] sm:$0xf]
        %v364 = vld [vmem:[%s1 + $0x6c] sm:$0xf]
        %v365 = vld [vmem:[%s1 + $0x70] sm:$0xf]
        %v366 = vld [vmem:[%s1 + $0x74] sm:$0xf]
        %v367 = vld [vmem:[%s1 + $0x78] sm:$0xf]
        %v368 = vld [vmem:[%s1 + $0x7c] sm:$0xf]
        %v467 = vunpack.c.l.b16 %v239
        %v468 = vunpack.c.h.b16 %v239
        %v469 = vunpack.c.l.b16 %v240
        %v470 = vunpack.c.h.b16 %v240
        %v471 = vunpack.c.l.b16 %v241
        %v472 = vunpack.c.h.b16 %v241
        %v473 = vunpack.c.l.b16 %v242
        %v474 = vunpack.c.h.b16 %v242
        %v475 = vunpack.c.l.b16 %v243
        %v476 = vunpack.c.h.b16 %v243
        %v477 = vunpack.c.l.b16 %v244
        %v478 = vunpack.c.h.b16 %v244
        %v479 = vunpack.c.l.b16 %v245
        %v480 = vunpack.c.h.b16 %v245
        %v481 = vunpack.c.l.b16 %v246
        %v482 = vunpack.c.h.b16 %v246
        %v483 = vunpack.c.l.b16 %v247
        %v484 = vunpack.c.h.b16 %v247
        %v485 = vunpack.c.l.b16 %v248
        %v486 = vunpack.c.h.b16 %v248
        %v487 = vunpack.c.l.b16 %v249
        %v488 = vunpack.c.h.b16 %v249
        %v489 = vunpack.c.l.b16 %v250
        %v490 = vunpack.c.h.b16 %v250
        %v491 = vunpack.c.l.b16 %v251
        %v492 = vunpack.c.h.b16 %v251
        %v493 = vunpack.c.l.b16 %v252
        %v494 = vunpack.c.h.b16 %v252
        %v495 = vunpack.c.l.b16 %v253
        %v496 = vunpack.c.h.b16 %v253
        %v497 = vunpack.c.l.b16 %v254
        %v498 = vunpack.c.h.b16 %v254
        %v499 = vunpack.c.l.b16 %v255
        %v500 = vunpack.c.h.b16 %v255
        %v501 = vunpack.c.l.b16 %v256
        %v502 = vunpack.c.h.b16 %v256
        %v503 = vunpack.c.l.b16 %v257
        %v504 = vunpack.c.h.b16 %v257
        %v505 = vunpack.c.l.b16 %v258
        %v506 = vunpack.c.h.b16 %v258
        %v507 = vunpack.c.l.b16 %v259
        %v508 = vunpack.c.h.b16 %v259
        %v509 = vunpack.c.l.b16 %v260
        %v510 = vunpack.c.h.b16 %v260
        %v511 = vunpack.c.l.b16 %v261
        %v512 = vunpack.c.h.b16 %v261
        %v513 = vunpack.c.l.b16 %v262
        %v514 = vunpack.c.h.b16 %v262
        %v515 = vunpack.c.l.b16 %v263
        %v516 = vunpack.c.h.b16 %v263
        %v517 = vunpack.c.l.b16 %v264
        %v518 = vunpack.c.h.b16 %v264
        %v519 = vunpack.c.l.b16 %v265
        %v520 = vunpack.c.h.b16 %v265
        %v521 = vunpack.c.l.b16 %v266
        %v522 = vunpack.c.h.b16 %v266
        %v523 = vunpack.c.l.b16 %v267
        %v524 = vunpack.c.h.b16 %v267
        %v525 = vunpack.c.l.b16 %v268
        %v526 = vunpack.c.h.b16 %v268
        %v527 = vunpack.c.l.b16 %v269
        %v528 = vunpack.c.h.b16 %v269
        %v529 = vunpack.c.l.b16 %v270
        %v530 = vunpack.c.h.b16 %v270
        %v531 = vunpack.c.l.b16 %v271
        %v532 = vunpack.c.h.b16 %v271
        %v533 = vunpack.c.l.b16 %v272
        %v534 = vunpack.c.h.b16 %v272
        %v535 = vunpack.c.l.b16 %v273
        %v536 = vunpack.c.h.b16 %v273
        %v537 = vunpack.c.l.b16 %v274
        %v538 = vunpack.c.h.b16 %v274
        %v539 = vunpack.c.l.b16 %v275
        %v540 = vunpack.c.h.b16 %v275
        %v541 = vunpack.c.l.b16 %v276
        %v542 = vunpack.c.h.b16 %v276
        %v543 = vunpack.c.l.b16 %v277
        %v544 = vunpack.c.h.b16 %v277
        %v545 = vunpack.c.l.b16 %v278
        %v546 = vunpack.c.h.b16 %v278
        %v547 = vunpack.c.l.b16 %v279
        %v548 = vunpack.c.h.b16 %v279
        %v549 = vunpack.c.l.b16 %v280
        %v550 = vunpack.c.h.b16 %v280
        %v551 = vunpack.c.l.b16 %v281
        %v552 = vunpack.c.h.b16 %v281
        %v553 = vunpack.c.l.b16 %v282
        %v554 = vunpack.c.h.b16 %v282
        %v555 = vunpack.c.l.b16 %v283
        %v556 = vunpack.c.h.b16 %v283
        %v557 = vunpack.c.l.b16 %v284
        %v558 = vunpack.c.h.b16 %v284
        %v559 = vunpack.c.l.b16 %v285
        %v560 = vunpack.c.h.b16 %v285
        %v561 = vunpack.c.l.b16 %v286
        %v562 = vunpack.c.h.b16 %v286
        %v563 = vunpack.c.l.b16 %v287
        %v564 = vunpack.c.h.b16 %v287
        %v565 = vunpack.c.l.b16 %v288
        %v566 = vunpack.c.h.b16 %v288
        %v567 = vunpack.c.l.b16 %v289
        %v568 = vunpack.c.h.b16 %v289
        %v569 = vunpack.c.l.b16 %v290
        %v570 = vunpack.c.h.b16 %v290
        %v571 = vunpack.c.l.b16 %v291
        %v572 = vunpack.c.h.b16 %v291
        %v573 = vunpack.c.l.b16 %v292
        %v574 = vunpack.c.h.b16 %v292
        %v575 = vunpack.c.l.b16 %v293
        %v576 = vunpack.c.h.b16 %v293
        %v577 = vunpack.c.l.b16 %v294
        %v578 = vunpack.c.h.b16 %v294
        %v579 = vunpack.c.l.b16 %v295
        %v580 = vunpack.c.h.b16 %v295
        %v581 = vunpack.c.l.b16 %v296
        %v582 = vunpack.c.h.b16 %v296
        %v583 = vunpack.c.l.b16 %v297
        %v584 = vunpack.c.h.b16 %v297
        %v585 = vunpack.c.l.b16 %v298
        %v586 = vunpack.c.h.b16 %v298
        %v587 = vunpack.c.l.b16 %v299
        %v588 = vunpack.c.h.b16 %v299
        %v589 = vunpack.c.l.b16 %v300
        %v590 = vunpack.c.h.b16 %v300
        %v591 = vunpack.c.l.b16 %v301
        %v592 = vunpack.c.h.b16 %v301
        %v593 = vunpack.c.l.b16 %v302
        %v594 = vunpack.c.h.b16 %v302
        %v595 = vunpack.c.l.b16 %v303
        %v596 = vunpack.c.h.b16 %v303
        %v597 = vunpack.c.l.b16 %v304
        %v598 = vunpack.c.h.b16 %v304
        %v599 = vunpack.c.l.b16 %v305
        %v600 = vunpack.c.h.b16 %v305
        %v601 = vunpack.c.l.b16 %v306
        %v602 = vunpack.c.h.b16 %v306
        %v603 = vunpack.c.l.b16 %v307
        %v604 = vunpack.c.h.b16 %v307
        %v605 = vunpack.c.l.b16 %v308
        %v606 = vunpack.c.h.b16 %v308
        %v607 = vunpack.c.l.b16 %v309
        %v608 = vunpack.c.h.b16 %v309
        %v609 = vunpack.c.l.b16 %v310
        %v610 = vunpack.c.h.b16 %v310
        %v611 = vunpack.c.l.b16 %v311
        %v612 = vunpack.c.h.b16 %v311
        %v613 = vunpack.c.l.b16 %v312
        %v614 = vunpack.c.h.b16 %v312
        %v615 = vunpack.c.l.b16 %v313
        %v616 = vunpack.c.h.b16 %v313
        %v617 = vunpack.c.l.b16 %v314
        %v618 = vunpack.c.h.b16 %v314
        %v619 = vunpack.c.l.b16 %v315
        %v620 = vunpack.c.h.b16 %v315
        %v621 = vunpack.c.l.b16 %v316
        %v622 = vunpack.c.h.b16 %v316
        %v623 = vunpack.c.l.b16 %v317
        %v624 = vunpack.c.h.b16 %v317
        %v625 = vunpack.c.l.b16 %v318
        %v626 = vunpack.c.h.b16 %v318
        %v627 = vunpack.c.l.b16 %v319
        %v628 = vunpack.c.h.b16 %v319
        %v629 = vunpack.c.l.b16 %v320
        %v630 = vunpack.c.h.b16 %v320
        %v631 = vunpack.c.l.b16 %v321
        %v632 = vunpack.c.h.b16 %v321
        %v633 = vunpack.c.l.b16 %v322
        %v634 = vunpack.c.h.b16 %v322
        %v635 = vunpack.c.l.b16 %v323
        %v636 = vunpack.c.h.b16 %v323
        %v637 = vunpack.c.l.b16 %v324
        %v638 = vunpack.c.h.b16 %v324
        %v639 = vunpack.c.l.b16 %v325
        %v640 = vunpack.c.h.b16 %v325
        %v641 = vunpack.c.l.b16 %v326
        %v642 = vunpack.c.h.b16 %v326
        %v643 = vunpack.c.l.b16 %v327
        %v644 = vunpack.c.h.b16 %v327
        %v645 = vunpack.c.l.b16 %v328
        %v646 = vunpack.c.h.b16 %v328
        %v647 = vunpack.c.l.b16 %v329
        %v648 = vunpack.c.h.b16 %v329
        %v649 = vunpack.c.l.b16 %v330
        %v650 = vunpack.c.h.b16 %v330
        %v651 = vunpack.c.l.b16 %v331
        %v652 = vunpack.c.h.b16 %v331
        %v653 = vunpack.c.l.b16 %v332
        %v654 = vunpack.c.h.b16 %v332
        %v655 = vunpack.c.l.b16 %v333
        %v656 = vunpack.c.h.b16 %v333
        %v657 = vunpack.c.l.b16 %v334
        %v658 = vunpack.c.h.b16 %v334
        %v659 = vunpack.c.l.b16 %v335
        %v660 = vunpack.c.h.b16 %v335
        %v661 = vunpack.c.l.b16 %v336
        %v662 = vunpack.c.h.b16 %v336
        %v663 = vpack.c.b16 %v469, %v467
        %v664 = vpack.c.b16 %v470, %v468
        %v665 = vpack.c.b16 %v473, %v471
        %v666 = vpack.c.b16 %v474, %v472
        %v667 = vpack.c.b16 %v477, %v475
        %v668 = vpack.c.b16 %v478, %v476
        %v669 = vpack.c.b16 %v481, %v479
        %v670 = vpack.c.b16 %v482, %v480
        %v671 = vpack.c.b16 %v485, %v483
        %v672 = vpack.c.b16 %v486, %v484
        %v673 = vpack.c.b16 %v489, %v487
        %v674 = vpack.c.b16 %v490, %v488
        %v675 = vpack.c.b16 %v493, %v491
        %v676 = vpack.c.b16 %v494, %v492
        %v677 = vpack.c.b16 %v497, %v495
        %v678 = vpack.c.b16 %v498, %v496
        %v679 = vpack.c.b16 %v501, %v499
        %v680 = vpack.c.b16 %v502, %v500
        %v681 = vpack.c.b16 %v505, %v503
        %v682 = vpack.c.b16 %v506, %v504
        %v683 = vpack.c.b16 %v509, %v507
        %v684 = vpack.c.b16 %v510, %v508
        %v685 = vpack.c.b16 %v513, %v511
        %v686 = vpack.c.b16 %v514, %v512
        %v687 = vpack.c.b16 %v517, %v515
        %v688 = vpack.c.b16 %v518, %v516
        %v689 = vpack.c.b16 %v521, %v519
        %v690 = vpack.c.b16 %v522, %v520
        %v691 = vpack.c.b16 %v525, %v523
        %v692 = vpack.c.b16 %v526, %v524
        %v693 = vpack.c.b16 %v529, %v527
        %v694 = vpack.c.b16 %v530, %v528
        %v695 = vpack.c.b16 %v533, %v531
        %v696 = vpack.c.b16 %v534, %v532
        %v697 = vpack.c.b16 %v537, %v535
        %v698 = vpack.c.b16 %v538, %v536
        %v699 = vpack.c.b16 %v541, %v539
        %v700 = vpack.c.b16 %v542, %v540
        %v701 = vpack.c.b16 %v545, %v543
        %v702 = vpack.c.b16 %v546, %v544
        %v703 = vpack.c.b16 %v549, %v547
        %v704 = vpack.c.b16 %v550, %v548
        %v705 = vpack.c.b16 %v553, %v551
        %v706 = vpack.c.b16 %v554, %v552
        %v707 = vpack.c.b16 %v557, %v555
        %v708 = vpack.c.b16 %v558, %v556
        %v709 = vpack.c.b16 %v561, %v559
        %v710 = vpack.c.b16 %v562, %v560
        %v711 = vpack.c.b16 %v565, %v563
        %v712 = vpack.c.b16 %v566, %v564
        %v713 = vpack.c.b16 %v569, %v567
        %v714 = vpack.c.b16 %v570, %v568
        %v715 = vpack.c.b16 %v573, %v571
        %v716 = vpack.c.b16 %v574, %v572
        %v717 = vpack.c.b16 %v577, %v575
        %v718 = vpack.c.b16 %v578, %v576
        %v719 = vpack.c.b16 %v581, %v579
        %v720 = vpack.c.b16 %v582, %v580
        %v721 = vpack.c.b16 %v585, %v583
        %v722 = vpack.c.b16 %v586, %v584
        %v723 = vpack.c.b16 %v589, %v587
        %v724 = vpack.c.b16 %v590, %v588
        %v725 = vpack.c.b16 %v593, %v591
        %v726 = vpack.c.b16 %v594, %v592
        %v727 = vpack.c.b16 %v597, %v595
        %v728 = vpack.c.b16 %v598, %v596
        %v729 = vpack.c.b16 %v601, %v599
        %v730 = vpack.c.b16 %v602, %v600
        %v731 = vpack.c.b16 %v605, %v603
        %v732 = vpack.c.b16 %v606, %v604
        %v733 = vpack.c.b16 %v609, %v607
        %v734 = vpack.c.b16 %v610, %v608
        %v735 = vpack.c.b16 %v613, %v611
        %v736 = vpack.c.b16 %v614, %v612
        %v737 = vpack.c.b16 %v617, %v615
        %v738 = vpack.c.b16 %v618, %v616
        %v739 = vpack.c.b16 %v621, %v619
        %v740 = vpack.c.b16 %v622, %v620
        %v741 = vpack.c.b16 %v625, %v623
        %v742 = vpack.c.b16 %v626, %v624
        %v743 = vpack.c.b16 %v629, %v627
        %v744 = vpack.c.b16 %v630, %v628
        %v745 = vpack.c.b16 %v633, %v631
        %v746 = vpack.c.b16 %v634, %v632
        %v747 = vpack.c.b16 %v637, %v635
        %v748 = vpack.c.b16 %v638, %v636
        %v749 = vpack.c.b16 %v641, %v639
        %v750 = vpack.c.b16 %v642, %v640
        %v751 = vpack.c.b16 %v645, %v643
        %v752 = vpack.c.b16 %v646, %v644
        %v753 = vpack.c.b16 %v649, %v647
        %v754 = vpack.c.b16 %v650, %v648
        %v755 = vpack.c.b16 %v653, %v651
        %v756 = vpack.c.b16 %v654, %v652
        %v757 = vpack.c.b16 %v657, %v655
        %v758 = vpack.c.b16 %v658, %v656
        %v759 = vpack.c.b16 %v661, %v659
        %v760 = vpack.c.b16 %v662, %v660
        %v891 = vunpack.c.l.b16 %v337
        %v892 = vunpack.c.l.b16 %v338
        %v893 = vunpack.c.l.b16 %v339
        %v894 = vunpack.c.l.b16 %v340
        %v895 = vunpack.c.l.b16 %v341
        %v896 = vunpack.c.l.b16 %v342
        %v897 = vunpack.c.l.b16 %v343
        %v898 = vunpack.c.l.b16 %v344
        %v899 = vunpack.c.l.b16 %v345
        %v900 = vunpack.c.l.b16 %v346
        %v901 = vunpack.c.l.b16 %v347
        %v902 = vunpack.c.l.b16 %v348
        %v903 = vunpack.c.l.b16 %v349
        %v904 = vunpack.c.l.b16 %v350
        %v905 = vunpack.c.l.b16 %v351
        %v906 = vunpack.c.l.b16 %v352
        %v907 = vunpack.c.l.b16 %v353
        %v908 = vunpack.c.l.b16 %v354
        %v909 = vunpack.c.l.b16 %v355
        %v910 = vunpack.c.l.b16 %v356
        %v911 = vunpack.c.l.b16 %v357
        %v912 = vunpack.c.l.b16 %v358
        %v913 = vunpack.c.l.b16 %v359
        %v914 = vunpack.c.l.b16 %v360
        %v915 = vunpack.c.l.b16 %v361
        %v916 = vunpack.c.l.b16 %v362
        %v917 = vunpack.c.l.b16 %v363
        %v918 = vunpack.c.l.b16 %v364
        %v919 = vunpack.c.l.b16 %v365
        %v920 = vunpack.c.l.b16 %v366
        %v921 = vunpack.c.l.b16 %v367
        %v922 = vunpack.c.l.b16 %v368
        %v923 = vpack.c.b16 %v892, %v891
        %v924 = vpack.c.b16 %v894, %v893
        %v925 = vpack.c.b16 %v896, %v895
        %v926 = vpack.c.b16 %v898, %v897
        %v927 = vpack.c.b16 %v900, %v899
        %v928 = vpack.c.b16 %v902, %v901
        %v929 = vpack.c.b16 %v904, %v903
        %v930 = vpack.c.b16 %v906, %v905
        %v931 = vpack.c.b16 %v908, %v907
        %v932 = vpack.c.b16 %v910, %v909
        %v933 = vpack.c.b16 %v912, %v911
        %v934 = vpack.c.b16 %v914, %v913
        %v935 = vpack.c.b16 %v916, %v915
        %v936 = vpack.c.b16 %v918, %v917
        %v937 = vpack.c.b16 %v920, %v919
        %v938 = vpack.c.b16 %v922, %v921
        %955 = vmatprep.subr.bf16.mxu0 0
        %956 = vmatpush1.bf16.msra.mxu0 %v923
        %957 = vmatprep.subr.bf16.mxu0 0
        %958 = vmatpush1.bf16.msra.mxu0 %v924
        %959 = vmatprep.subr.bf16.mxu0 0
        %960 = vmatpush1.bf16.msra.mxu0 %v925
        %961 = vmatprep.subr.bf16.mxu0 0
        %962 = vmatpush1.bf16.msra.mxu0 %v926
        %963 = vmatprep.subr.bf16.mxu0 0
        %964 = vmatpush1.bf16.msra.mxu0 %v927
        %965 = vmatprep.subr.bf16.mxu0 0
        %966 = vmatpush1.bf16.msra.mxu0 %v928
        %967 = vmatprep.subr.bf16.mxu0 0
        %968 = vmatpush1.bf16.msra.mxu0 %v929
        %969 = vmatprep.subr.bf16.mxu0 0
        %970 = vmatpush1.bf16.msra.mxu0 %v930
        %971 = vmatprep.subr.bf16.mxu0 0
        %972 = vmatpush1.bf16.msra.mxu0 %v931
        %973 = vmatprep.subr.bf16.mxu0 0
        %974 = vmatpush1.bf16.msra.mxu0 %v932
        %975 = vmatprep.subr.bf16.mxu0 0
        %976 = vmatpush1.bf16.msra.mxu0 %v933
        %977 = vmatprep.subr.bf16.mxu0 0
        %978 = vmatpush1.bf16.msra.mxu0 %v934
        %979 = vmatprep.subr.bf16.mxu0 0
        %980 = vmatpush1.bf16.msra.mxu0 %v935
        %981 = vmatprep.subr.bf16.mxu0 0
        %982 = vmatpush1.bf16.msra.mxu0 %v936
        %983 = vmatprep.subr.bf16.mxu0 0
        %984 = vmatpush1.bf16.msra.mxu0 %v937
        %985 = vmatprep.subr.bf16.mxu0 0
        %986 = vmatpush1.bf16.msra.mxu0 %v938
        %987 = vmatprep.mubr.bf16.mxu0 %v664
        %988 = vmatmul.mubr.bf16.gmra.mrb[0].mxu0 %v663
        %v989 = vpop.f32.mrb[0].mxu0
        %v990 = vadd.f32 0.0, %v989
        %v991 = vpop.f32.mrb[0].mxu0
        %v992 = vpop.f32.mrb[0].mxu0
        %v993 = vadd.f32 0.0, %v992
        %v994 = vpop.f32.mrb[0].mxu0
        %995 = vmatprep.mubr.bf16.mxu0 %v666
        %996 = vmatmul.mubr.bf16.gmra.mrb[0].mxu0 %v665
        %v997 = vpop.f32.mrb[0].mxu0
        %v998 = vadd.f32 0.0, %v997
        %v999 = vpop.f32.mrb[0].mxu0
        %v1000 = vpop.f32.mrb[0].mxu0
        %v1001 = vadd.f32 0.0, %v1000
        %v1002 = vpop.f32.mrb[0].mxu0
        %1003 = vmatprep.mubr.bf16.mxu0 %v668
        %1004 = vmatmul.mubr.bf16.gmra.mrb[0].mxu0 %v667
        %v1005 = vpop.f32.mrb[0].mxu0
        %v1006 = vadd.f32 0.0, %v1005
        %v1007 = vpop.f32.mrb[0].mxu0
        %v1008 = vpop.f32.mrb[0].mxu0
        %v1009 = vadd.f32 0.0, %v1008
        %v1010 = vpop.f32.mrb[0].mxu0
        %1011 = vmatprep.mubr.bf16.mxu0 %v670
        %1012 = vmatmul.mubr.bf16.gmra.mrb[0].mxu0 %v669
        %v1013 = vpop.f32.mrb[0].mxu0
        %v1014 = vadd.f32 0.0, %v1013
        %v1015 = vpop.f32.mrb[0].mxu0
        %v1016 = vpop.f32.mrb[0].mxu0
        %v1017 = vadd.f32 0.0, %v1016
        %v1018 = vpop.f32.mrb[0].mxu0
        %1019 = vmatprep.mubr.bf16.mxu0 %v672
        %1020 = vmatmul.mubr.bf16.gmra.mrb[0].mxu0 %v671
        %v1021 = vpop.f32.mrb[0].mxu0
        %v1022 = vadd.f32 0.0, %v1021
        %v1023 = vpop.f32.mrb[0].mxu0
        %v1024 = vpop.f32.mrb[0].mxu0
        %v1025 = vadd.f32 0.0, %v1024
        %v1026 = vpop.f32.mrb[0].mxu0
        %1027 = vmatprep.mubr.bf16.mxu0 %v674
        %1028 = vmatmul.mubr.bf16.gmra.mrb[0].mxu0 %v673
        %v1029 = vpop.f32.mrb[0].mxu0
        %v1030 = vadd.f32 0.0, %v1029
        %v1031 = vpop.f32.mrb[0].mxu0
        %v1032 = vpop.f32.mrb[0].mxu0
        %v1033 = vadd.f32 0.0, %v1032
        %v1034 = vpop.f32.mrb[0].mxu0
        %1035 = vmatprep.mubr.bf16.mxu0 %v676
        %1036 = vmatmul.mubr.bf16.gmra.mrb[0].mxu0 %v675
        %v1037 = vpop.f32.mrb[0].mxu0
        %v1038 = vadd.f32 0.0, %v1037
        %v1039 = vpop.f32.mrb[0].mxu0
        %v1040 = vpop.f32.mrb[0].mxu0
        %v1041 = vadd.f32 0.0, %v1040
        %v1042 = vpop.f32.mrb[0].mxu0
        %1043 = vmatprep.mubr.bf16.mxu0 %v678
        %1044 = vmatmul.mubr.bf16.gmra.mrb[0].mxu0 %v677
        %v1045 = vpop.f32.mrb[0].mxu0
        %v1046 = vadd.f32 0.0, %v1045
        %v1047 = vpop.f32.mrb[0].mxu0
        %v1048 = vpop.f32.mrb[0].mxu0
        %v1049 = vadd.f32 0.0, %v1048
        %v1050 = vpop.f32.mrb[0].mxu0
        %1051 = vmatprep.mubr.bf16.mxu0 %v680
        %1052 = vmatmul.mubr.bf16.gmra.mrb[0].mxu0 %v679
        %v1053 = vpop.f32.mrb[0].mxu0
        %v1054 = vadd.f32 0.0, %v1053
        %v1055 = vpop.f32.mrb[0].mxu0
        %v1056 = vpop.f32.mrb[0].mxu0
        %v1057 = vadd.f32 0.0, %v1056
        %v1058 = vpop.f32.mrb[0].mxu0
        %1059 = vmatprep.mubr.bf16.mxu0 %v682
        %1060 = vmatmul.mubr.bf16.gmra.mrb[0].mxu0 %v681
        %v1061 = vpop.f32.mrb[0].mxu0
        %v1062 = vadd.f32 0.0, %v1061
        %v1063 = vpop.f32.mrb[0].mxu0
        %v1064 = vpop.f32.mrb[0].mxu0
        %v1065 = vadd.f32 0.0, %v1064
        %v1066 = vpop.f32.mrb[0].mxu0
        %1067 = vmatprep.mubr.bf16.mxu0 %v684
        %1068 = vmatmul.mubr.bf16.gmra.mrb[0].mxu0 %v683
        %v1069 = vpop.f32.mrb[0].mxu0
        %v1070 = vadd.f32 0.0, %v1069
        %v1071 = vpop.f32.mrb[0].mxu0
        %v1072 = vpop.f32.mrb[0].mxu0
        %v1073 = vadd.f32 0.0, %v1072
        %v1074 = vpop.f32.mrb[0].mxu0
        %1075 = vmatprep.mubr.bf16.mxu0 %v686
        %1076 = vmatmul.mubr.bf16.gmra.mrb[0].mxu0 %v685
        %v1077 = vpop.f32.mrb[0].mxu0
        %v1078 = vadd.f32 0.0, %v1077
        %v1079 = vpop.f32.mrb[0].mxu0
        %v1080 = vpop.f32.mrb[0].mxu0
        %v1081 = vadd.f32 0.0, %v1080
        %v1082 = vpop.f32.mrb[0].mxu0
        %1083 = vmatprep.mubr.bf16.mxu0 %v688
        %1084 = vmatmul.mubr.bf16.gmra.mrb[0].mxu0 %v687
        %v1085 = vpop.f32.mrb[0].mxu0
        %v1086 = vadd.f32 0.0, %v1085
        %v1087 = vpop.f32.mrb[0].mxu0
        %v1088 = vpop.f32.mrb[0].mxu0
        %v1089 = vadd.f32 0.0, %v1088
        %v1090 = vpop.f32.mrb[0].mxu0
        %1091 = vmatprep.mubr.bf16.mxu0 %v690
        %1092 = vmatmul.mubr.bf16.gmra.mrb[0].mxu0 %v689
        %v1093 = vpop.f32.mrb[0].mxu0
        %v1094 = vadd.f32 0.0, %v1093
        %v1095 = vpop.f32.mrb[0].mxu0
        %v1096 = vpop.f32.mrb[0].mxu0
        %v1097 = vadd.f32 0.0, %v1096
        %v1098 = vpop.f32.mrb[0].mxu0
        %1099 = vmatprep.mubr.bf16.mxu0 %v692
        %1100 = vmatmul.mubr.bf16.gmra.mrb[0].mxu0 %v691
        %v1101 = vpop.f32.mrb[0].mxu0
        %v1102 = vadd.f32 0.0, %v1101
        %v1103 = vpop.f32.mrb[0].mxu0
        %v1104 = vpop.f32.mrb[0].mxu0
        %v1105 = vadd.f32 0.0, %v1104
        %v1106 = vpop.f32.mrb[0].mxu0
        %1107 = vmatprep.mubr.bf16.mxu0 %v694
        %1108 = vmatmul.mubr.bf16.gmra.mrb[0].mxu0 %v693
        %v1109 = vpop.f32.mrb[0].mxu0
        %v1110 = vadd.f32 0.0, %v1109
        %v1111 = vpop.f32.mrb[0].mxu0
        %v1112 = vpop.f32.mrb[0].mxu0
        %v1113 = vadd.f32 0.0, %v1112
        %v1114 = vpop.f32.mrb[0].mxu0
        %1115 = vmatprep.mubr.bf16.mxu0 %v696
        %1116 = vmatmul.mubr.bf16.gmra.mrb[0].mxu0 %v695
        %v1117 = vpop.f32.mrb[0].mxu0
        %v1118 = vadd.f32 0.0, %v1117
        %v1119 = vpop.f32.mrb[0].mxu0
        %v1120 = vpop.f32.mrb[0].mxu0
        %v1121 = vadd.f32 0.0, %v1120
        %v1122 = vpop.f32.mrb[0].mxu0
        %1123 = vmatprep.mubr.bf16.mxu0 %v698
        %1124 = vmatmul.mubr.bf16.gmra.mrb[0].mxu0 %v697
        %v1125 = vpop.f32.mrb[0].mxu0
        %v1126 = vadd.f32 0.0, %v1125
        %v1127 = vpop.f32.mrb[0].mxu0
        %v1128 = vpop.f32.mrb[0].mxu0
        %v1129 = vadd.f32 0.0, %v1128
        %v1130 = vpop.f32.mrb[0].mxu0
        %1131 = vmatprep.mubr.bf16.mxu0 %v700
        %1132 = vmatmul.mubr.bf16.gmra.mrb[0].mxu0 %v699
        %v1133 = vpop.f32.mrb[0].mxu0
        %v1134 = vadd.f32 0.0, %v1133
        %v1135 = vpop.f32.mrb[0].mxu0
        %v1136 = vpop.f32.mrb[0].mxu0
        %v1137 = vadd.f32 0.0, %v1136
        %v1138 = vpop.f32.mrb[0].mxu0
        %1139 = vmatprep.mubr.bf16.mxu0 %v702
        %1140 = vmatmul.mubr.bf16.gmra.mrb[0].mxu0 %v701
        %v1141 = vpop.f32.mrb[0].mxu0
        %v1142 = vadd.f32 0.0, %v1141
        %v1143 = vpop.f32.mrb[0].mxu0
        %v1144 = vpop.f32.mrb[0].mxu0
        %v1145 = vadd.f32 0.0, %v1144
        %v1146 = vpop.f32.mrb[0].mxu0
        %1147 = vmatprep.mubr.bf16.mxu0 %v704
        %1148 = vmatmul.mubr.bf16.gmra.mrb[0].mxu0 %v703
        %v1149 = vpop.f32.mrb[0].mxu0
        %v1150 = vadd.f32 0.0, %v1149
        %v1151 = vpop.f32.mrb[0].mxu0
        %v1152 = vpop.f32.mrb[0].mxu0
        %v1153 = vadd.f32 0.0, %v1152
        %v1154 = vpop.f32.mrb[0].mxu0
        %1155 = vmatprep.mubr.bf16.mxu0 %v706
        %1156 = vmatmul.mubr.bf16.gmra.mrb[0].mxu0 %v705
        %v1157 = vpop.f32.mrb[0].mxu0
        %v1158 = vadd.f32 0.0, %v1157
        %v1159 = vpop.f32.mrb[0].mxu0
        %v1160 = vpop.f32.mrb[0].mxu0
        %v1161 = vadd.f32 0.0, %v1160
        %v1162 = vpop.f32.mrb[0].mxu0
        %1163 = vmatprep.mubr.bf16.mxu0 %v708
        %1164 = vmatmul.mubr.bf16.gmra.mrb[0].mxu0 %v707
        %v1165 = vpop.f32.mrb[0].mxu0
        %v1166 = vadd.f32 0.0, %v1165
        %v1167 = vpop.f32.mrb[0].mxu0
        %v1168 = vpop.f32.mrb[0].mxu0
        %v1169 = vadd.f32 0.0, %v1168
        %v1170 = vpop.f32.mrb[0].mxu0
        %1171 = vmatprep.mubr.bf16.mxu0 %v710
        %1172 = vmatmul.mubr.bf16.gmra.mrb[0].mxu0 %v709
        %v1173 = vpop.f32.mrb[0].mxu0
        %v1174 = vadd.f32 0.0, %v1173
        %v1175 = vpop.f32.mrb[0].mxu0
        %v1176 = vpop.f32.mrb[0].mxu0
        %v1177 = vadd.f32 0.0, %v1176
        %v1178 = vpop.f32.mrb[0].mxu0
        %1179 = vmatprep.mubr.bf16.mxu0 %v712
        %1180 = vmatmul.mubr.bf16.gmra.mrb[0].mxu0 %v711
        %v1181 = vpop.f32.mrb[0].mxu0
        %v1182 = vadd.f32 0.0, %v1181
        %v1183 = vpop.f32.mrb[0].mxu0
        %v1184 = vpop.f32.mrb[0].mxu0
        %v1185 = vadd.f32 0.0, %v1184
        %v1186 = vpop.f32.mrb[0].mxu0
        %1187 = vmatprep.mubr.bf16.mxu0 %v714
        %1188 = vmatmul.mubr.bf16.gmra.mrb[0].mxu0 %v713
        %v1189 = vpop.f32.mrb[0].mxu0
        %v1190 = vadd.f32 0.0, %v1189
        %v1191 = vpop.f32.mrb[0].mxu0
        %v1192 = vpop.f32.mrb[0].mxu0
        %v1193 = vadd.f32 0.0, %v1192
        %v1194 = vpop.f32.mrb[0].mxu0
        %1195 = vmatprep.mubr.bf16.mxu0 %v716
        %1196 = vmatmul.mubr.bf16.gmra.mrb[0].mxu0 %v715
        %v1197 = vpop.f32.mrb[0].mxu0
        %v1198 = vadd.f32 0.0, %v1197
        %v1199 = vpop.f32.mrb[0].mxu0
        %v1200 = vpop.f32.mrb[0].mxu0
        %v1201 = vadd.f32 0.0, %v1200
        %v1202 = vpop.f32.mrb[0].mxu0
        %1203 = vmatprep.mubr.bf16.mxu0 %v718
        %1204 = vmatmul.mubr.bf16.gmra.mrb[0].mxu0 %v717
        %v1205 = vpop.f32.mrb[0].mxu0
        %v1206 = vadd.f32 0.0, %v1205
        %v1207 = vpop.f32.mrb[0].mxu0
        %v1208 = vpop.f32.mrb[0].mxu0
        %v1209 = vadd.f32 0.0, %v1208
        %v1210 = vpop.f32.mrb[0].mxu0
        %1211 = vmatprep.mubr.bf16.mxu0 %v720
        %1212 = vmatmul.mubr.bf16.gmra.mrb[0].mxu0 %v719
        %v1213 = vpop.f32.mrb[0].mxu0
        %v1214 = vadd.f32 0.0, %v1213
        %v1215 = vpop.f32.mrb[0].mxu0
        %v1216 = vpop.f32.mrb[0].mxu0
        %v1217 = vadd.f32 0.0, %v1216
        %v1218 = vpop.f32.mrb[0].mxu0
        %1219 = vmatprep.mubr.bf16.mxu0 %v722
        %1220 = vmatmul.mubr.bf16.gmra.mrb[0].mxu0 %v721
        %v1221 = vpop.f32.mrb[0].mxu0
        %v1222 = vadd.f32 0.0, %v1221
        %v1223 = vpop.f32.mrb[0].mxu0
        %v1224 = vpop.f32.mrb[0].mxu0
        %v1225 = vadd.f32 0.0, %v1224
        %v1226 = vpop.f32.mrb[0].mxu0
        %1227 = vmatprep.mubr.bf16.mxu0 %v724
        %1228 = vmatmul.mubr.bf16.gmra.mrb[0].mxu0 %v723
        %v1229 = vpop.f32.mrb[0].mxu0
        %v1230 = vadd.f32 0.0, %v1229
        %v1231 = vpop.f32.mrb[0].mxu0
        %v1232 = vpop.f32.mrb[0].mxu0
        %v1233 = vadd.f32 0.0, %v1232
        %v1234 = vpop.f32.mrb[0].mxu0
        %1235 = vmatprep.mubr.bf16.mxu0 %v726
        %1236 = vmatmul.mubr.bf16.gmra.mrb[0].mxu0 %v725
        %v1237 = vpop.f32.mrb[0].mxu0
        %v1238 = vadd.f32 0.0, %v1237
        %v1239 = vpop.f32.mrb[0].mxu0
        %v1240 = vpop.f32.mrb[0].mxu0
        %v1241 = vadd.f32 0.0, %v1240
        %v1242 = vpop.f32.mrb[0].mxu0
        %1243 = vmatprep.mubr.bf16.mxu0 %v728
        %1244 = vmatmul.mubr.bf16.gmra.mrb[0].mxu0 %v727
        %v1245 = vpop.f32.mrb[0].mxu0
        %v1246 = vadd.f32 0.0, %v1245
        %v1247 = vpop.f32.mrb[0].mxu0
        %v1248 = vpop.f32.mrb[0].mxu0
        %v1249 = vadd.f32 0.0, %v1248
        %v1250 = vpop.f32.mrb[0].mxu0
        %1251 = vmatprep.mubr.bf16.mxu0 %v730
        %1252 = vmatmul.mubr.bf16.gmra.mrb[0].mxu0 %v729
        %v1253 = vpop.f32.mrb[0].mxu0
        %v1254 = vadd.f32 0.0, %v1253
        %v1255 = vpop.f32.mrb[0].mxu0
        %v1256 = vpop.f32.mrb[0].mxu0
        %v1257 = vadd.f32 0.0, %v1256
        %v1258 = vpop.f32.mrb[0].mxu0
        %1259 = vmatprep.mubr.bf16.mxu0 %v732
        %1260 = vmatmul.mubr.bf16.gmra.mrb[0].mxu0 %v731
        %v1261 = vpop.f32.mrb[0].mxu0
        %v1262 = vadd.f32 0.0, %v1261
        %v1263 = vpop.f32.mrb[0].mxu0
        %v1264 = vpop.f32.mrb[0].mxu0
        %v1265 = vadd.f32 0.0, %v1264
        %v1266 = vpop.f32.mrb[0].mxu0
        %1267 = vmatprep.mubr.bf16.mxu0 %v734
        %1268 = vmatmul.mubr.bf16.gmra.mrb[0].mxu0 %v733
        %v1269 = vpop.f32.mrb[0].mxu0
        %v1270 = vadd.f32 0.0, %v1269
        %v1271 = vpop.f32.mrb[0].mxu0
        %v1272 = vpop.f32.mrb[0].mxu0
        %v1273 = vadd.f32 0.0, %v1272
        %v1274 = vpop.f32.mrb[0].mxu0
        %1275 = vmatprep.mubr.bf16.mxu0 %v736
        %1276 = vmatmul.mubr.bf16.gmra.mrb[0].mxu0 %v735
        %v1277 = vpop.f32.mrb[0].mxu0
        %v1278 = vadd.f32 0.0, %v1277
        %v1279 = vpop.f32.mrb[0].mxu0
        %v1280 = vpop.f32.mrb[0].mxu0
        %v1281 = vadd.f32 0.0, %v1280
        %v1282 = vpop.f32.mrb[0].mxu0
        %1283 = vmatprep.mubr.bf16.mxu0 %v738
        %1284 = vmatmul.mubr.bf16.gmra.mrb[0].mxu0 %v737
        %v1285 = vpop.f32.mrb[0].mxu0
        %v1286 = vadd.f32 0.0, %v1285
        %v1287 = vpop.f32.mrb[0].mxu0
        %v1288 = vpop.f32.mrb[0].mxu0
        %v1289 = vadd.f32 0.0, %v1288
        %v1290 = vpop.f32.mrb[0].mxu0
        %1291 = vmatprep.mubr.bf16.mxu0 %v740
        %1292 = vmatmul.mubr.bf16.gmra.mrb[0].mxu0 %v739
        %v1293 = vpop.f32.mrb[0].mxu0
        %v1294 = vadd.f32 0.0, %v1293
        %v1295 = vpop.f32.mrb[0].mxu0
        %v1296 = vpop.f32.mrb[0].mxu0
        %v1297 = vadd.f32 0.0, %v1296
        %v1298 = vpop.f32.mrb[0].mxu0
        %1299 = vmatprep.mubr.bf16.mxu0 %v742
        %1300 = vmatmul.mubr.bf16.gmra.mrb[0].mxu0 %v741
        %v1301 = vpop.f32.mrb[0].mxu0
        %v1302 = vadd.f32 0.0, %v1301
        %v1303 = vpop.f32.mrb[0].mxu0
        %v1304 = vpop.f32.mrb[0].mxu0
        %v1305 = vadd.f32 0.0, %v1304
        %v1306 = vpop.f32.mrb[0].mxu0
        %1307 = vmatprep.mubr.bf16.mxu0 %v744
        %1308 = vmatmul.mubr.bf16.gmra.mrb[0].mxu0 %v743
        %v1309 = vpop.f32.mrb[0].mxu0
        %v1310 = vadd.f32 0.0, %v1309
        %v1311 = vpop.f32.mrb[0].mxu0
        %v1312 = vpop.f32.mrb[0].mxu0
        %v1313 = vadd.f32 0.0, %v1312
        %v1314 = vpop.f32.mrb[0].mxu0
        %1315 = vmatprep.mubr.bf16.mxu0 %v746
        %1316 = vmatmul.mubr.bf16.gmra.mrb[0].mxu0 %v745
        %v1317 = vpop.f32.mrb[0].mxu0
        %v1318 = vadd.f32 0.0, %v1317
        %v1319 = vpop.f32.mrb[0].mxu0
        %v1320 = vpop.f32.mrb[0].mxu0
        %v1321 = vadd.f32 0.0, %v1320
        %v1322 = vpop.f32.mrb[0].mxu0
        %1323 = vmatprep.mubr.bf16.mxu0 %v748
        %1324 = vmatmul.mubr.bf16.gmra.mrb[0].mxu0 %v747
        %v1325 = vpop.f32.mrb[0].mxu0
        %v1326 = vadd.f32 0.0, %v1325
        %v1327 = vpop.f32.mrb[0].mxu0
        %v1328 = vpop.f32.mrb[0].mxu0
        %v1329 = vadd.f32 0.0, %v1328
        %v1330 = vpop.f32.mrb[0].mxu0
        %1331 = vmatprep.mubr.bf16.mxu0 %v750
        %1332 = vmatmul.mubr.bf16.gmra.mrb[0].mxu0 %v749
        %v1333 = vpop.f32.mrb[0].mxu0
        %v1334 = vadd.f32 0.0, %v1333
        %v1335 = vpop.f32.mrb[0].mxu0
        %v1336 = vpop.f32.mrb[0].mxu0
        %v1337 = vadd.f32 0.0, %v1336
        %v1338 = vpop.f32.mrb[0].mxu0
        %1339 = vmatprep.mubr.bf16.mxu0 %v752
        %1340 = vmatmul.mubr.bf16.gmra.mrb[0].mxu0 %v751
        %v1341 = vpop.f32.mrb[0].mxu0
        %v1342 = vadd.f32 0.0, %v1341
        %v1343 = vpop.f32.mrb[0].mxu0
        %v1344 = vpop.f32.mrb[0].mxu0
        %v1345 = vadd.f32 0.0, %v1344
        %v1346 = vpop.f32.mrb[0].mxu0
        %1347 = vmatprep.mubr.bf16.mxu0 %v754
        %1348 = vmatmul.mubr.bf16.gmra.mrb[0].mxu0 %v753
        %v1349 = vpop.f32.mrb[0].mxu0
        %v1350 = vadd.f32 0.0, %v1349
        %v1351 = vpop.f32.mrb[0].mxu0
        %v1352 = vpop.f32.mrb[0].mxu0
        %v1353 = vadd.f32 0.0, %v1352
        %v1354 = vpop.f32.mrb[0].mxu0
        %1355 = vmatprep.mubr.bf16.mxu0 %v756
        %1356 = vmatmul.mubr.bf16.gmra.mrb[0].mxu0 %v755
        %v1357 = vpop.f32.mrb[0].mxu0
        %v1358 = vadd.f32 0.0, %v1357
        %v1359 = vpop.f32.mrb[0].mxu0
        %v1360 = vpop.f32.mrb[0].mxu0
        %v1361 = vadd.f32 0.0, %v1360
        %v1362 = vpop.f32.mrb[0].mxu0
        %1363 = vmatprep.mubr.bf16.mxu0 %v758
        %1364 = vmatmul.mubr.bf16.gmra.mrb[0].mxu0 %v757
        %v1365 = vpop.f32.mrb[0].mxu0
        %v1366 = vadd.f32 0.0, %v1365
        %v1367 = vpop.f32.mrb[0].mxu0
        %v1368 = vpop.f32.mrb[0].mxu0
        %v1369 = vadd.f32 0.0, %v1368
        %v1370 = vpop.f32.mrb[0].mxu0
        %1371 = vmatprep.mubr.bf16.mxu0 %v760
        %1372 = vmatmul.mubr.bf16.gmra.mrb[0].mxu0 %v759
        %v1373 = vpop.f32.mrb[0].mxu0
        %v1374 = vadd.f32 0.0, %v1373
        %v1375 = vpop.f32.mrb[0].mxu0
        %v1376 = vpop.f32.mrb[0].mxu0
        %v1377 = vadd.f32 0.0, %v1376
        %v1378 = vpop.f32.mrb[0].mxu0
        %1379 = vdwg.mxu0
        %v1380 = vmax.f32 %v990, 0.0
        %v1381 = vmax.f32 %v993, 0.0
        %v1382 = vmax.f32 %v998, 0.0
        %v1383 = vmax.f32 %v1001, 0.0
        %v1384 = vmax.f32 %v1006, 0.0
        %v1385 = vmax.f32 %v1009, 0.0
        %v1386 = vmax.f32 %v1014, 0.0
        %v1387 = vmax.f32 %v1017, 0.0
        %v1388 = vmax.f32 %v1022, 0.0
        %v1389 = vmax.f32 %v1025, 0.0
        %v1390 = vmax.f32 %v1030, 0.0
        %v1391 = vmax.f32 %v1033, 0.0
        %v1392 = vmax.f32 %v1038, 0.0
        %v1393 = vmax.f32 %v1041, 0.0
        %v1394 = vmax.f32 %v1046, 0.0
        %v1395 = vmax.f32 %v1049, 0.0
        %v1396 = vmax.f32 %v1054, 0.0
        %v1397 = vmax.f32 %v1057, 0.0
        %v1398 = vmax.f32 %v1062, 0.0
        %v1399 = vmax.f32 %v1065, 0.0
        %v1400 = vmax.f32 %v1070, 0.0
        %v1401 = vmax.f32 %v1073, 0.0
        %v1402 = vmax.f32 %v1078, 0.0
        %v1403 = vmax.f32 %v1081, 0.0
        %v1404 = vmax.f32 %v1086, 0.0
        %v1405 = vmax.f32 %v1089, 0.0
        %v1406 = vmax.f32 %v1094, 0.0
        %v1407 = vmax.f32 %v1097, 0.0
        %v1408 = vmax.f32 %v1102, 0.0
        %v1409 = vmax.f32 %v1105, 0.0
        %v1410 = vmax.f32 %v1110, 0.0
        %v1411 = vmax.f32 %v1113, 0.0
        %v1412 = vmax.f32 %v1118, 0.0
        %v1413 = vmax.f32 %v1121, 0.0
        %v1414 = vmax.f32 %v1126, 0.0
        %v1415 = vmax.f32 %v1129, 0.0
        %v1416 = vmax.f32 %v1134, 0.0
        %v1417 = vmax.f32 %v1137, 0.0
        %v1418 = vmax.f32 %v1142, 0.0
        %v1419 = vmax.f32 %v1145, 0.0
        %v1420 = vmax.f32 %v1150, 0.0
        %v1421 = vmax.f32 %v1153, 0.0
        %v1422 = vmax.f32 %v1158, 0.0
        %v1423 = vmax.f32 %v1161, 0.0
        %v1424 = vmax.f32 %v1166, 0.0
        %v1425 = vmax.f32 %v1169, 0.0
        %v1426 = vmax.f32 %v1174, 0.0
        %v1427 = vmax.f32 %v1177, 0.0
        %v1428 = vmax.f32 %v1182, 0.0
        %v1429 = vmax.f32 %v1185, 0.0
        %v1430 = vmax.f32 %v1190, 0.0
        %v1431 = vmax.f32 %v1193, 0.0
        %v1432 = vmax.f32 %v1198, 0.0
        %v1433 = vmax.f32 %v1201, 0.0
        %v1434 = vmax.f32 %v1206, 0.0
        %v1435 = vmax.f32 %v1209, 0.0
        %v1436 = vmax.f32 %v1214, 0.0
        %v1437 = vmax.f32 %v1217, 0.0
        %v1438 = vmax.f32 %v1222, 0.0
        %v1439 = vmax.f32 %v1225, 0.0
        %v1440 = vmax.f32 %v1230, 0.0
        %v1441 = vmax.f32 %v1233, 0.0
        %v1442 = vmax.f32 %v1238, 0.0
        %v1443 = vmax.f32 %v1241, 0.0
        %v1444 = vmax.f32 %v1246, 0.0
        %v1445 = vmax.f32 %v1249, 0.0
        %v1446 = vmax.f32 %v1254, 0.0
        %v1447 = vmax.f32 %v1257, 0.0
        %v1448 = vmax.f32 %v1262, 0.0
        %v1449 = vmax.f32 %v1265, 0.0
        %v1450 = vmax.f32 %v1270, 0.0
        %v1451 = vmax.f32 %v1273, 0.0
        %v1452 = vmax.f32 %v1278, 0.0
        %v1453 = vmax.f32 %v1281, 0.0
        %v1454 = vmax.f32 %v1286, 0.0
        %v1455 = vmax.f32 %v1289, 0.0
        %v1456 = vmax.f32 %v1294, 0.0
        %v1457 = vmax.f32 %v1297, 0.0
        %v1458 = vmax.f32 %v1302, 0.0
        %v1459 = vmax.f32 %v1305, 0.0
        %v1460 = vmax.f32 %v1310, 0.0
        %v1461 = vmax.f32 %v1313, 0.0
        %v1462 = vmax.f32 %v1318, 0.0
        %v1463 = vmax.f32 %v1321, 0.0
        %v1464 = vmax.f32 %v1326, 0.0
        %v1465 = vmax.f32 %v1329, 0.0
        %v1466 = vmax.f32 %v1334, 0.0
        %v1467 = vmax.f32 %v1337, 0.0
        %v1468 = vmax.f32 %v1342, 0.0
        %v1469 = vmax.f32 %v1345, 0.0
        %v1470 = vmax.f32 %v1350, 0.0
        %v1471 = vmax.f32 %v1353, 0.0
        %v1472 = vmax.f32 %v1358, 0.0
        %v1473 = vmax.f32 %v1361, 0.0
        %v1474 = vmax.f32 %v1366, 0.0
        %v1475 = vmax.f32 %v1369, 0.0
        %v1476 = vmax.f32 %v1374, 0.0
        %v1477 = vmax.f32 %v1377, 0.0
        %v1478 = vld [vmem:[#allocation2] sm:$0x1]
        %v1479 = vadd.f32 %v1380, %v1381
        %v1480 = vadd.f32 %v1479, %v1382
        %v1481 = vadd.f32 %v1480, %v1383
        %v1482 = vadd.f32 %v1481, %v1384
        %v1483 = vadd.f32 %v1482, %v1385
        %v1484 = vadd.f32 %v1483, %v1386
        %v1485 = vadd.f32 %v1484, %v1387
        %v1486 = vadd.f32 %v1485, %v1388
        %v1487 = vadd.f32 %v1486, %v1389
        %v1488 = vadd.f32 %v1487, %v1390
        %v1489 = vadd.f32 %v1488, %v1391
        %v1490 = vadd.f32 %v1489, %v1392
        %v1491 = vadd.f32 %v1490, %v1393
        %v1492 = vadd.f32 %v1491, %v1394
        %v1493 = vadd.f32 %v1492, %v1395
        %v1494 = vadd.f32 %v1493, %v1396
        %v1495 = vadd.f32 %v1494, %v1397
        %v1496 = vadd.f32 %v1495, %v1398
        %v1497 = vadd.f32 %v1496, %v1399
        %v1498 = vadd.f32 %v1497, %v1400
        %v1499 = vadd.f32 %v1498, %v1401
        %v1500 = vadd.f32 %v1499, %v1402
        %v1501 = vadd.f32 %v1500, %v1403
        %v1502 = vadd.f32 %v1501, %v1404
        %v1503 = vadd.f32 %v1502, %v1405
        %v1504 = vadd.f32 %v1503, %v1406
        %v1505 = vadd.f32 %v1504, %v1407
        %v1506 = vadd.f32 %v1505, %v1408
        %v1507 = vadd.f32 %v1506, %v1409
        %v1508 = vadd.f32 %v1507, %v1410
        %v1509 = vadd.f32 %v1508, %v1411
        %v1510 = vadd.f32 %v1509, %v1412
        %v1511 = vadd.f32 %v1510, %v1413
        %v1512 = vadd.f32 %v1511, %v1414
        %v1513 = vadd.f32 %v1512, %v1415
        %v1514 = vadd.f32 %v1513, %v1416
        %v1515 = vadd.f32 %v1514, %v1417
        %v1516 = vadd.f32 %v1515, %v1418
        %v1517 = vadd.f32 %v1516, %v1419
        %v1518 = vadd.f32 %v1517, %v1420
        %v1519 = vadd.f32 %v1518, %v1421
        %v1520 = vadd.f32 %v1519, %v1422
        %v1521 = vadd.f32 %v1520, %v1423
        %v1522 = vadd.f32 %v1521, %v1424
        %v1523 = vadd.f32 %v1522, %v1425
        %v1524 = vadd.f32 %v1523, %v1426
        %v1525 = vadd.f32 %v1524, %v1427
        %v1526 = vadd.f32 %v1525, %v1428
        %v1527 = vadd.f32 %v1526, %v1429
        %v1528 = vadd.f32 %v1527, %v1430
        %v1529 = vadd.f32 %v1528, %v1431
        %v1530 = vadd.f32 %v1529, %v1432
        %v1531 = vadd.f32 %v1530, %v1433
        %v1532 = vadd.f32 %v1531, %v1434
        %v1533 = vadd.f32 %v1532, %v1435
        %v1534 = vadd.f32 %v1533, %v1436
        %v1535 = vadd.f32 %v1534, %v1437
        %v1536 = vadd.f32 %v1535, %v1438
        %v1537 = vadd.f32 %v1536, %v1439
        %v1538 = vadd.f32 %v1537, %v1440
        %v1539 = vadd.f32 %v1538, %v1441
        %v1540 = vadd.f32 %v1539, %v1442
        %v1541 = vadd.f32 %v1540, %v1443
        %v1542 = vadd.f32 %v1541, %v1444
        %v1543 = vadd.f32 %v1542, %v1445
        %v1544 = vadd.f32 %v1543, %v1446
        %v1545 = vadd.f32 %v1544, %v1447
        %v1546 = vadd.f32 %v1545, %v1448
        %v1547 = vadd.f32 %v1546, %v1449
        %v1548 = vadd.f32 %v1547, %v1450
        %v1549 = vadd.f32 %v1548, %v1451
        %v1550 = vadd.f32 %v1549, %v1452
        %v1551 = vadd.f32 %v1550, %v1453
        %v1552 = vadd.f32 %v1551, %v1454
        %v1553 = vadd.f32 %v1552, %v1455
        %v1554 = vadd.f32 %v1553, %v1456
        %v1555 = vadd.f32 %v1554, %v1457
        %v1556 = vadd.f32 %v1555, %v1458
        %v1557 = vadd.f32 %v1556, %v1459
        %v1558 = vadd.f32 %v1557, %v1460
        %v1559 = vadd.f32 %v1558, %v1461
        %v1560 = vadd.f32 %v1559, %v1462
        %v1561 = vadd.f32 %v1560, %v1463
        %v1562 = vadd.f32 %v1561, %v1464
        %v1563 = vadd.f32 %v1562, %v1465
        %v1564 = vadd.f32 %v1563, %v1466
        %v1565 = vadd.f32 %v1564, %v1467
        %v1566 = vadd.f32 %v1565, %v1468
        %v1567 = vadd.f32 %v1566, %v1469
        %v1568 = vadd.f32 %v1567, %v1470
        %v1569 = vadd.f32 %v1568, %v1471
        %v1570 = vadd.f32 %v1569, %v1472
        %v1571 = vadd.f32 %v1570, %v1473
        %v1572 = vadd.f32 %v1571, %v1474
        %v1573 = vadd.f32 %v1572, %v1475
        %v1574 = vadd.f32 %v1573, %v1476
        %v1575 = vadd.f32 %v1574, %v1477
        %v1576 = vrot.slane %v1575, 4
        %v1577 = vadd.f32 %v1575, %v1576
        %v1578 = vrot.slane %v1577, 2
        %v1579 = vadd.f32 %v1577, %v1578
        %v1580 = vrot.slane %v1579, 1
        %v1581 = vadd.f32 %v1579, %v1580
        %v1582 = vadd.f32 %v1478, %v1581
        %1583 = vst [vmem:[#allocation2] sm:$0x1] %v1582
        // Predicated region
        $region45: #{tpu_custom_call.1} parent=35 // pred_check
          %p1584 = pneg %p234
        $region46: #{tpu_custom_call.1} parent=35 // pred_check_branch
          %1586 = sbr.rel (%p1584) target = $region48
        $region47: #{tpu_custom_call.1} parent=35 // pred_region
          %v1587 = vld [vmem:[#allocation2] sm:$0x1]
          %v1588 = vmul.f32 %v1587, 0.0012755102
          %v1589 = vld [vmem:[%s2] sm:$0xff]
          %v1590 = vld [vmem:[%s2 + $0x8] sm:$0xff]
          %v1591 = vld [vmem:[%s2 + $0x10] sm:$0xff]
          %v1592 = vld [vmem:[%s2 + $0x18] sm:$0xff]
          %v1593 = vld [vmem:[%s2 + $0x20] sm:$0xff]
          %v1594 = vld [vmem:[%s2 + $0x28] sm:$0xff]
          %v1595 = vld [vmem:[%s2 + $0x30] sm:$0xff]
          %v1596 = vld [vmem:[%s2 + $0x38] sm:$0xff]
          %v1597 = vld [vmem:[%s2 + $0x40] sm:$0xff]
          %v1598 = vld [vmem:[%s2 + $0x48] sm:$0xff]
          %v1599 = vld [vmem:[%s2 + $0x50] sm:$0xff]
          %v1600 = vld [vmem:[%s2 + $0x58] sm:$0xff]
          %v1601 = vld [vmem:[%s2 + $0x60] sm:$0xff]
          %v1602 = vld [vmem:[%s2 + $0x68] sm:$0xff]
          %v1603 = vld [vmem:[%s2 + $0x70] sm:$0xff]
          %v1604 = vld [vmem:[%s2 + $0x78] sm:$0xff]
          %v1605 = vld [vmem:[%s3] sm:$0x1]
          %1606 = vmatprep.subr.mxu0 0.0
          %1607 = vmatpush1.msra.mxu0 %v1589
          %1608 = vmatprep.subr.mxu0 0.0
          %1609 = vmatpush1.msra.mxu0 %v1590
          %1610 = vmatprep.subr.mxu0 0.0
          %1611 = vmatpush1.msra.mxu0 %v1591
          %1612 = vmatprep.subr.mxu0 0.0
          %1613 = vmatpush1.msra.mxu0 %v1592
          %1614 = vmatprep.subr.mxu0 0.0
          %1615 = vmatpush1.msra.mxu0 %v1593
          %1616 = vmatprep.subr.mxu0 0.0
          %1617 = vmatpush1.msra.mxu0 %v1594
          %1618 = vmatprep.subr.mxu0 0.0
          %1619 = vmatpush1.msra.mxu0 %v1595
          %1620 = vmatprep.subr.mxu0 0.0
          %1621 = vmatpush1.msra.mxu0 %v1596
          %1622 = vmatprep.subr.mxu0 0.0
          %1623 = vmatpush1.msra.mxu0 %v1597
          %1624 = vmatprep.subr.mxu0 0.0
          %1625 = vmatpush1.msra.mxu0 %v1598
          %1626 = vmatprep.subr.mxu0 0.0
          %1627 = vmatpush1.msra.mxu0 %v1599
          %1628 = vmatprep.subr.mxu0 0.0
          %1629 = vmatpush1.msra.mxu0 %v1600
          %1630 = vmatprep.subr.mxu0 0.0
          %1631 = vmatpush1.msra.mxu0 %v1601
          %1632 = vmatprep.subr.mxu0 0.0
          %1633 = vmatpush1.msra.mxu0 %v1602
          %1634 = vmatprep.subr.mxu0 0.0
          %1635 = vmatpush1.msra.mxu0 %v1603
          %1636 = vmatprep.subr.mxu0 0.0
          %1637 = vmatpush1.msra.mxu0 %v1604
          %1638 = vmatprep.subr.mxu0 0.0
          %1639 = vmatpush1.msra.mxu0 0.0
          %1640 = vmatprep.subr.mxu0 0.0
          %1641 = vmatpush1.msra.mxu0 0.0
          %1642 = vmatprep.subr.mxu0 0.0
          %1643 = vmatpush1.msra.mxu0 0.0
          %1644 = vmatprep.subr.mxu0 0.0
          %1645 = vmatpush1.msra.mxu0 0.0
          %1646 = vmatprep.subr.mxu0 0.0
          %1647 = vmatpush1.msra.mxu0 0.0
          %1648 = vmatprep.subr.mxu0 0.0
          %1649 = vmatpush1.msra.mxu0 0.0
          %1650 = vmatprep.subr.mxu0 0.0
          %1651 = vmatpush1.msra.mxu0 0.0
          %1652 = vmatprep.subr.mxu0 0.0
          %1653 = vmatpush1.msra.mxu0 0.0
          %1654 = vmatprep.subr.mxu0 0.0
          %1655 = vmatpush1.msra.mxu0 0.0
          %1656 = vmatprep.subr.mxu0 0.0
          %1657 = vmatpush1.msra.mxu0 0.0
          %1658 = vmatprep.subr.mxu0 0.0
          %1659 = vmatpush1.msra.mxu0 0.0
          %1660 = vmatprep.subr.mxu0 0.0
          %1661 = vmatpush1.msra.mxu0 0.0
          %1662 = vmatprep.subr.mxu0 0.0
          %1663 = vmatpush1.msra.mxu0 0.0
          %1664 = vmatprep.subr.mxu0 0.0
          %1665 = vmatpush1.msra.mxu0 0.0
          %1666 = vmatprep.subr.mxu0 0.0
          %1667 = vmatpush1.msra.mxu0 0.0
          %1668 = vmatprep.subr.mxu0 0.0
          %1669 = vmatpush1.msra.mxu0 0.0
          %1670 = vmatprep.mubr.f32.mxu0 0.0
          %1671 = vmatmul.mubr.f32.gmra.mrb[0].mxu0 %v1588
          %v1672 = vpop.f32.mrb[0].mxu0
          %v1673 = vadd.f32 %v1605, %v1672
          %v1674 = vpop.f32.mrb[0].mxu0
          %1675 = vdwg.mxu0
          %vm1676 = vcmask 253952
          %1677 = vst.msk [vmem:[%s231] sm:$0x1] %vm1676, %v1673
        $region48: #{tpu_custom_call.1} parent=35 // pred_fallthru
          _
        %s1678 = sand.u32 %s132, 1
        %s1679 = scalar_lea.sflag [#allocation5], %s1678
        %s1680 = sand.u32 %s132, 1
        %s1681 = scalar_lea.vmem [#allocation6], %s1680
        // Predicated region
        $region49: #{tpu_custom_call.1} parent=35 // pred_check
          %p1682 = pneg %p142
        $region50: #{tpu_custom_call.1} parent=35 // pred_check_branch
          %1684 = sbr.rel (%p1682) target = $region52
        $region51: #{tpu_custom_call.1} parent=35 // pred_region
          %s1686 = ssub.s32 16, 16
          %1687 = vsyncadd %s1679, %s1686
          %s1688 = smul.addr %s25, 16
          %s1689 = scalar_lea.hbm %s4, %s1688
          %s1691 = sshll.u32 %s1681, 4
          %s1692 = int_to_ptr.vmem [resolvable:$true] %s1691
          %1694 = dma.vmem_to_hbm [thread:$0]  %s1692, 16, %s1689, %s1679
        $region52: #{tpu_custom_call.1} parent=35 // pred_fallthru
          _
      $region36: #{tpu_custom_call.1} parent=5 // pred_fallthru
        _
      %p1695 = scmp.le.s32.totalorder 2, %s16
      // Predicated region
      $region53: #{tpu_custom_call.1} parent=5 // pred_check
        %p1696 = pneg %p1695
      $region54: #{tpu_custom_call.1} parent=5 // pred_check_branch
        %1698 = sbr.rel (%p1696) target = $region56
      $region55: #{tpu_custom_call.1} parent=5 // pred_region
        %s1699 = ssub.s32 %s16, 2
        // Predicated region
        $region57: #{tpu_custom_call.1} parent=55 // pred_check
          %p1700 = pneg %p148
        $region58: #{tpu_custom_call.1} parent=55 // pred_check_branch
          %1702 = sbr.rel (%p1700) target = $region60
        $region59: #{tpu_custom_call.1} parent=55 // pred_region
          %s1703 = sand.u32 %s133, 1
          %s1704 = scalar_lea.sflag [#allocation5], %s1703
          %s1705 = sand.u32 %s133, 1
          %s1706 = scalar_lea.vmem [#allocation6], %s1705
          %1707 = dma.done %s1704, 16
        $region60: #{tpu_custom_call.1} parent=55 // pred_fallthru
          _
      $region56: #{tpu_custom_call.1} parent=5 // pred_fallthru
        _
    $region6: #{tpu_custom_call.1} parent=1 // loop_footer
      %s20 = sadd.s32 1, %s16
    $region7: #{tpu_custom_call.1} parent=1 // loop_footer_branch
      %15 = sbr.rel target = $region3
    $region8: #{tpu_custom_call.1} parent=1 // loop_exit
      _
    %1708 = vsyncpa [#allocation4], 1
    %s1709 = scalar_lea.sflag [#allocation4], 1
    %1710 = vsyncpa %s1709, 1
    %1711 = vsyncpa [#allocation5], 1
    %s1712 = scalar_lea.sflag [#allocation5], 1
    %1713 = vsyncpa %s1712, 1

</llo_original>
